<compile_context>
chip_gen: v7x
topology: tpu7x:2x2x1
jax: 0.10.0
libtpu: 0.0.40
codegen_flags: <defaults>
</compile_context>

<pallas_src>
import functools

import jax
import jax.numpy as jnp
from jax.experimental import pallas as pl
from jax.experimental.pallas import tpu as pltpu

_EPS = 1e-5


def _round_up(x, m):
    return (x + m - 1) // m * m


def _sublane_align(dtype):
    # f32 -> 8, bf16 -> 16, int8/fp8 -> 32 sublane packing.
    return {1: 32, 2: 16, 4: 8}.get(jnp.dtype(dtype).itemsize, 8)


@functools.lru_cache(maxsize=1)
def _vmem_caps():
    """Returns (working-set budget, vmem_limit_bytes) per TPU generation."""
    try:
        phys = int(pltpu.get_tpu_info().vmem_capacity_bytes)
    except Exception:  # query unavailable: fall back to conservative (v7x) sizes
        phys = 64 * 1024 * 1024
    if phys >= 96 * 1024 * 1024:           # v5e / v6e: 128 MiB physical VMEM
        budget, limit = 56 * 1024 * 1024, 96 * 1024 * 1024
    else:                                  # v7x: 64 MiB physical per TensorCore
        budget, limit = 32 * 1024 * 1024, 48 * 1024 * 1024
    return budget, min(limit, phys)


# ----------------------------------------------------------------------------
# Generic path: normalize over the last axis of (rows, C).
# ----------------------------------------------------------------------------
def _ln_rows_kernel(x_ref, w_ref, b_ref, o_ref):
    # x_ref: (tile_rows, C); w_ref / b_ref: (1, C); o_ref: (tile_rows, C).
    x = x_ref[...].astype(jnp.float32)
    c = x.shape[-1]
    inv_c = 1.0 / c
    # Per-row sums on the MXU (idle slot) instead of cross-lane XLU reduces.
    # Every output lane of the dot holds the same row-sum, so lane 0 gives the
    # keepdims value directly.  Precision.HIGHEST keeps ~f32 accuracy via the
    # multi-pass bf16 MXU decomposition.
    ones = jnp.ones((c, 128), jnp.float32)
    mu = jnp.dot(x, ones, precision=jax.lax.Precision.HIGHEST,
                 preferred_element_type=jnp.float32)[:, :1] * inv_c
    xc = x - mu
    var = jnp.dot(xc * xc, ones, precision=jax.lax.Precision.HIGHEST,
                  preferred_element_type=jnp.float32)[:, :1] * inv_c
    inv = jax.lax.rsqrt(var + _EPS)                      # unbiased=False variance
    w = w_ref[...].astype(jnp.float32)
    b = b_ref[...].astype(jnp.float32)
    # TODO(synk): on v6e/v7x with bf16 I/O the affine epilogue could run in
    # bf16 (VALU-bound regime); kept in f32 (f32 I/O here, v5e has no bf16 VALU).
    o_ref[...] = (xc * inv * w + b).astype(o_ref.dtype)


def _auto_tile_rows(rows, c, dtype, *, target_steps=8):
    itemsize = jnp.dtype(dtype).itemsize
    budget, _ = _vmem_caps()
    sub = _sublane_align(dtype)
    c_lanes = _round_up(c, 128)                          # VMEM lane padding
    # in + out blocks double-buffered, plus ~3 f32 temporaries in the kernel.
    bytes_per_row = c_lanes * (4 * itemsize + 3 * 4)
    max_rows = max(sub, (budget // bytes_per_row) // sub * sub)
    # Keep >= target_steps grid steps alive so v7x's 2 TensorCores both get work.
    per_step = _round_up(pl.cdiv(rows, target_steps), sub)
    tile = max(sub, min(max_rows, per_step))
    return min(tile, _round_up(rows, sub))


@jax.jit
def with_bias_layernorm(x, weight, bias):
    """x: (..., C); weight, bias: (C,).  LayerNorm over the last axis.

    Note: when C < 128 and the data is naturally (B, C, H, W) (Restormer),
    prefer with_bias_layernorm_nchw — this layout pays a 128/C lane-padding
    tax and masked stores even though the reductions now run on the MXU.
    """
    orig_shape = x.shape
    C = orig_shape[-1]
    x2d = x.reshape(-1, C)
    rows = x2d.shape[0]
    tile_rows = _auto_tile_rows(rows, C, x.dtype)
    grid = (pl.cdiv(rows, tile_rows),)
    _, vmem_limit = _vmem_caps()

    n = rows * C
    cost = pl.CostEstimate(                               # advisory only
        flops=12 * n,
        transcendentals=rows,
        bytes_accessed=2 * n * jnp.dtype(x.dtype).itemsize + 2 * C * 4,
    )

    out = pl.pallas_call(
        _ln_rows_kernel,
        out_shape=jax.ShapeDtypeStruct((rows, C), x.dtype),
        grid_spec=pltpu.PrefetchScalarGridSpec(
            num_scalar_prefetch=0,
            grid=grid,
            in_specs=[
                pl.BlockSpec((tile_rows, C), lambda i: (i, 0)),
                pl.BlockSpec((1, C), lambda i: (0, 0)),
                pl.BlockSpec((1, C), lambda i: (0, 0)),
            ],
            out_specs=pl.BlockSpec((tile_rows, C), lambda i: (i, 0)),
        ),
        compiler_params=pltpu.CompilerParams(
            dimension_semantics=("parallel",),
            vmem_limit_bytes=vmem_limit,
        ),
        cost_estimate=cost,
    )(x2d, weight.reshape(1, C), bias.reshape(1, C))
    return out.reshape(orig_shape)


# ----------------------------------------------------------------------------
# Lane-dense path: x stays (B, C, H, W); channels on sublanes, tokens on lanes.
# Equivalent to to_4d(WithBias_LayerNorm(to_3d(x))).
# ----------------------------------------------------------------------------
def _ln_cfirst_kernel(x_ref, w_ref, b_ref, o_ref):
    # x_ref: (1, C, tile_cols); w_ref / b_ref: (C, 1).
    x = x_ref[...].astype(jnp.float32)
    # Reduction over C (sublanes): mostly VPU vreg adds + a small XLU tail.
    mu = jnp.mean(x, axis=1, keepdims=True)
    xc = x - mu
    var = jnp.mean(xc * xc, axis=1, keepdims=True)       # unbiased=False
    inv = jax.lax.rsqrt(var + _EPS)
    # (C,1) weight/bias stay lane-replicated; no inner loop, so the broadcast
    # happens once per grid step (nothing to hoist).
    w = w_ref[...].astype(jnp.float32)
    b = b_ref[...].astype(jnp.float32)
    o_ref[...] = (xc * inv * w + b).astype(o_ref.dtype)


def _auto_tile_cols(batch, cols, c, dtype, *, min_total_steps=8):
    itemsize = jnp.dtype(dtype).itemsize
    budget, _ = _vmem_caps()
    c_sub = _round_up(c, _sublane_align(dtype))          # sublane padding of C
    # in + out blocks double-buffered, plus ~3 f32 temporaries in the kernel.
    bytes_per_col = c_sub * (4 * itemsize + 3 * 4)
    max_cols = max(128, (budget // bytes_per_col) // 128 * 128)
    # Target >= min_total_steps grid steps overall (B * col-tiles): both v7x
    # TensorCores get work even at B == 1 and prolog/epilog DMAs are hidden.
    steps_per_batch = max(1, pl.cdiv(min_total_steps, batch))
    per_step = _round_up(pl.cdiv(cols, steps_per_batch), 128)
    tile = max(128, min(max_cols, per_step))
    return min(tile, _round_up(cols, 128))


@jax.jit
def with_bias_layernorm_nchw(x, weight, bias):
    """x: (B, C, H, W); weight, bias: (C,).  LayerNorm over the channel axis.

    Lane-dense Restormer form: identical to to_4d(LN(to_3d(x))) but with
    H*W tokens on lanes -> unmasked full-width stores, no 48->128 lane padding.
    """
    B, C, H, W = x.shape
    cols = H * W
    x3d = x.reshape(B, C, cols)
    tile_cols = _auto_tile_cols(B, cols, C, x.dtype)
    grid = (B, pl.cdiv(cols, tile_cols))
    _, vmem_limit = _vmem_caps()

    n = B * C * cols
    cost = pl.CostEstimate(                               # advisory only
        flops=9 * n,
        transcendentals=B * cols,
        bytes_accessed=2 * n * jnp.dtype(x.dtype).itemsize + 2 * C * 4,
    )

    # TODO(synk): if an xprof trace on v7x shows exposed per-step DMA gaps,
    # add pipeline_mode=pl.Buffered(3) to the x BlockSpec and shrink tile_cols.
    out = pl.pallas_call(
        _ln_cfirst_kernel,
        out_shape=jax.ShapeDtypeStruct((B, C, cols), x.dtype),
        grid_spec=pltpu.PrefetchScalarGridSpec(
            num_scalar_prefetch=0,
            grid=grid,
            in_specs=[
                pl.BlockSpec((1, C, tile_cols), lambda b, j: (b, 0, j)),
                pl.BlockSpec((C, 1), lambda b, j: (0, 0)),
                pl.BlockSpec((C, 1), lambda b, j: (0, 0)),
            ],
            out_specs=pl.BlockSpec((1, C, tile_cols), lambda b, j: (b, 0, j)),
        ),
        compiler_params=pltpu.CompilerParams(
            dimension_semantics=("parallel", "parallel"),
            vmem_limit_bytes=vmem_limit,
        ),
        cost_estimate=cost,
    )(x3d, weight.reshape(C, 1), bias.reshape(C, 1))
    return out.reshape(B, C, H, W)


# ----------------------------------------------------------------------------
# References (pure JAX) and self-test.
# ----------------------------------------------------------------------------
def _reference_last_axis(x, weight, bias):
    x32 = x.astype(jnp.float32)
    mu = jnp.mean(x32, axis=-1, keepdims=True)
    var = jnp.mean((x32 - mu) ** 2, axis=-1, keepdims=True)
    return ((x32 - mu) / jnp.sqrt(var + _EPS) * weight + bias).astype(x.dtype)


def _reference_nchw(x, weight, bias):
    x32 = x.astype(jnp.float32)
    mu = jnp.mean(x32, axis=1, keepdims=True)
    var = jnp.mean((x32 - mu) ** 2, axis=1, keepdims=True)
    y = (x32 - mu) / jnp.sqrt(var + _EPS)
    return (y * weight[None, :, None, None] + bias[None, :, None, None]).astype(x.dtype)


if __name__ == "__main__":
    keys = jax.random.split(jax.random.PRNGKey(0), 8)

    B, C, H, W = 2, 48, 16, 16
    # Generic path input: tokens as produced by Restormer's to_3d -> (B, H*W, C).
    x_tokens = jax.random.normal(keys[0], (B, H * W, C), dtype=jnp.float32)
    # Lane-dense path input: native NCHW feature map.
    x_nchw = jax.random.normal(keys[1], (B, C, H, W), dtype=jnp.float32)
    # Random per-channel affine params (ones/zeros would hide a wrong axis map).
    weight = jax.random.normal(keys[2], (C,), dtype=jnp.float32)
    bias = jax.random.normal(keys[3], (C,), dtype=jnp.float32)

    out_tokens = jax.block_until_ready(with_bias_layernorm(x_tokens, weight, bias))
    out_nchw = jax.block_until_ready(with_bias_layernorm_nchw(x_nchw, weight, bias))

    ref_tokens = _reference_last_axis(x_tokens, weight, bias)
    ref_nchw = _reference_nchw(x_nchw, weight, bias)

    assert out_tokens.shape == x_tokens.shape
    assert out_nchw.shape == x_nchw.shape
    assert jnp.allclose(out_tokens, ref_tokens, atol=1e-4, rtol=1e-4), "last-axis path mismatch"
    assert jnp.allclose(out_nchw, ref_nchw, atol=1e-4, rtol=1e-4), "channels-first path mismatch"

    # Wide-channel + ragged-row case for the generic path (C >= 128,
    # rows % tile_rows != 0 exercises the masked partial last block).
    C2 = 256
    x_wide = jax.random.normal(keys[4], (3, 100, C2), dtype=jnp.float32)
    w2 = jax.random.normal(keys[5], (C2,), dtype=jnp.float32)
    b2 = jax.random.normal(keys[6], (C2,), dtype=jnp.float32)
    out_wide = jax.block_until_ready(with_bias_layernorm(x_wide, w2, b2))
    ref_wide = _reference_last_axis(x_wide, w2, b2)
    assert out_wide.shape == x_wide.shape
    assert jnp.allclose(out_wide, ref_wide, atol=1e-4, rtol=1e-4), "wide-channel path mismatch"

    print("KERNEL_OK")
</pallas_src>

<mosaic_0001>
module attributes {stable_mosaic.version = 11 : i64} {
  func.func @_ln_rows_kernel(%arg0: i32, %arg1: memref<64x48xf32, #tpu.memory_space<vmem>>, %arg2: memref<1x48xf32, #tpu.memory_space<vmem>>, %arg3: memref<1x48xf32, #tpu.memory_space<vmem>>, %arg4: memref<64x48xf32, #tpu.memory_space<vmem>>) attributes {dimension_semantics = [#tpu.dimension_semantics<parallel>], iteration_bounds = array<i64: 8>, scalar_prefetch = 0 : i64, scratch_operands = 0 : i64, tpu.core_type = #tpu.core_type<tc>, window_params = [{transform_indices = @transform_0, window_bounds = array<i64: 64, 48>}, {pipeline_mode = #tpu.pipeline_mode<synchronous>, transform_indices = @transform_1, window_bounds = array<i64: 1, 48>}, {pipeline_mode = #tpu.pipeline_mode<synchronous>, transform_indices = @transform_2, window_bounds = array<i64: 1, 48>}, {transform_indices = @transform_3, window_bounds = array<i64: 64, 48>}]} {
    %c0 = arith.constant 0 : index
    %c0_0 = arith.constant 0 : index
    %0 = vector.load %arg1[%c0, %c0_0] : memref<64x48xf32, #tpu.memory_space<vmem>>, vector<64x48xf32>
    %cst = arith.constant 1.000000e+00 : f32
    %1 = vector.broadcast %cst : f32 to vector<48x128xf32>
    %cst_1 = arith.constant dense<0.000000e+00> : vector<64x128xf32>
    %2 = tpu.matmul %0, %1, %cst_1 {dimension_numbers = #tpu.dot_dimension_numbers<[1], [0], [0], [1], [0, 0, 1, 1], [], []>, precision = #tpu.contract_precision<fp32>} : vector<64x48xf32>, vector<48x128xf32>, vector<64x128xf32> -> vector<64x128xf32>
    %3 = vector.extract_strided_slice %2 {offsets = [0, 0], sizes = [64, 1], strides = [1, 1]} : vector<64x128xf32> to vector<64x1xf32>
    %cst_2 = arith.constant 0.020833334 : f32
    %4 = vector.broadcast %cst_2 : f32 to vector<64x1xf32>
    %5 = arith.mulf %3, %4 : vector<64x1xf32>
    %6 = vector.broadcast %5 : vector<64x1xf32> to vector<64x48xf32>
    %7 = arith.subf %0, %6 : vector<64x48xf32>
    %8 = arith.mulf %7, %7 : vector<64x48xf32>
    %cst_3 = arith.constant dense<0.000000e+00> : vector<64x128xf32>
    %9 = tpu.matmul %8, %1, %cst_3 {dimension_numbers = #tpu.dot_dimension_numbers<[1], [0], [0], [1], [0, 0, 1, 1], [], []>, precision = #tpu.contract_precision<fp32>} : vector<64x48xf32>, vector<48x128xf32>, vector<64x128xf32> -> vector<64x128xf32>
    %10 = vector.extract_strided_slice %9 {offsets = [0, 0], sizes = [64, 1], strides = [1, 1]} : vector<64x128xf32> to vector<64x1xf32>
    %cst_4 = arith.constant 0.020833334 : f32
    %11 = vector.broadcast %cst_4 : f32 to vector<64x1xf32>
    %12 = arith.mulf %10, %11 : vector<64x1xf32>
    %cst_5 = arith.constant 9.99999974E-6 : f32
    %13 = vector.broadcast %cst_5 : f32 to vector<64x1xf32>
    %14 = arith.addf %12, %13 : vector<64x1xf32>
    %15 = math.rsqrt %14 : vector<64x1xf32>
    %c0_6 = arith.constant 0 : index
    %c0_7 = arith.constant 0 : index
    %16 = vector.load %arg2[%c0_6, %c0_7] : memref<1x48xf32, #tpu.memory_space<vmem>>, vector<1x48xf32>
    %c0_8 = arith.constant 0 : index
    %c0_9 = arith.constant 0 : index
    %17 = vector.load %arg3[%c0_8, %c0_9] : memref<1x48xf32, #tpu.memory_space<vmem>>, vector<1x48xf32>
    %18 = vector.broadcast %15 : vector<64x1xf32> to vector<64x48xf32>
    %19 = arith.mulf %7, %18 : vector<64x48xf32>
    %20 = vector.broadcast %16 : vector<1x48xf32> to vector<64x48xf32>
    %21 = arith.mulf %19, %20 : vector<64x48xf32>
    %22 = vector.broadcast %17 : vector<1x48xf32> to vector<64x48xf32>
    %23 = arith.addf %21, %22 : vector<64x48xf32>
    %c0_10 = arith.constant 0 : index
    %c0_11 = arith.constant 0 : index
    %24 = vector.load %arg4[%c0_10, %c0_11] : memref<64x48xf32, #tpu.memory_space<vmem>>, vector<64x48xf32>
    tpu.vector_store %arg4[%c0_10, %c0_11], %23 {strides = array<i32>} : memref<64x48xf32, #tpu.memory_space<vmem>>, vector<64x48xf32>,
    return
  }
  func.func @transform_0(%arg0: i32) -> (i32, i32) {
    %c0_i32 = arith.constant 0 : i32
    %c0_i32_0 = arith.constant 0 : i32
    return %arg0, %c0_i32 : i32, i32
  }
  func.func @transform_1(%arg0: i32) -> (i32, i32) {
    %c0_i32 = arith.constant 0 : i32
    %c0_i32_0 = arith.constant 0 : i32
    %c0_i32_1 = arith.constant 0 : i32
    return %c0_i32, %c0_i32_0 : i32, i32
  }
  func.func @transform_2(%arg0: i32) -> (i32, i32) {
    %c0_i32 = arith.constant 0 : i32
    %c0_i32_0 = arith.constant 0 : i32
    %c0_i32_1 = arith.constant 0 : i32
    return %c0_i32, %c0_i32_0 : i32, i32
  }
  func.func @transform_3(%arg0: i32) -> (i32, i32) {
    %c0_i32 = arith.constant 0 : i32
    %c0_i32_0 = arith.constant 0 : i32
    return %arg0, %c0_i32 : i32, i32
  }
}

</mosaic_0001>

<llo_original>
// kernel: with_bias_layernorm.1
$region0: #{with_bias_layernorm.1}
  #allocation0 [shape = 'u32[]', space=smem, size = 0x4, offset = 0x4, fixed_abs, tag = 'smem constant byte address 0x4 - core index']
  #allocation1 [shape = 'u32[144,128]{1,0:T(1,128)}', space=vmem, size = 0x12000, scoped, tag = 'internal scratch']
  %s0 = inlined_call_operand.vmem [shape: f32[512,48], index: 0, kind: input, shape index: {}]
  %s1 = inlined_call_operand.vmem [shape: f32[1,48], index: 1, kind: input, shape index: {}]
  %s2 = inlined_call_operand.vmem [shape: f32[1,48], index: 2, kind: input, shape index: {}]
  %s3 = inlined_call_operand.vmem [shape: f32[512,48], index: 3, kind: output, shape index: {}]
  %s4 = sld [smem:[#allocation0]]
  $region45: #{with_bias_layernorm.1} parent=0
    _
  %s6 = ssub.s32 1, %s4
  %s7 = scalar_select 0, %s6, %s4
  loop: start=0, step=1, limit=10
  $region2: #{with_bias_layernorm.1} parent=0 // loop_pre_header
    _
  $region3: #{with_bias_layernorm.1} parent=0 // loop_header
    %s9 = sphi 0, %s13
    %p10 = scmp.ge.s32.totalorder %s9, 10
    %s19 = sphi 0, %s21
    %s22 = sphi 0, %s19
    %s23 = sphi 0, %s22
    %s39 = sphi 0, %s23
    %s43 = sphi 0, %s43
    %s45 = sphi 0, %s43
    %s46 = sphi 0, %s45
    %s60 = sphi 0, %s46
    %s64 = sphi 0, %s64
    %s66 = sphi 0, %s64
    %s67 = sphi 0, %s66
    %s81 = sphi 0, %s67
    %s87 = sphi 0, %s89
    %s90 = sphi 0, %s87
    %s91 = sphi 0, %s90
    %s107 = sphi 0, %s91
  $region4: #{with_bias_layernorm.1} parent=0 // loop_header_branch
    %12 = sbr.rel (%p10) target = $region8
  $region5: #{with_bias_layernorm.1} parent=0 // loop_body
    %s14 = ssub.s32 %s9, 1
    %s15 = ssub.s32 %s9, 2
    %s16 = sadd.s32 %s9, 1
    %s17 = ssub.s32 %s9, %s16
    %p18 = scmp.eq.s32.totalorder %s17, 0
    %s20 = sadd.s32 %s19, 1
    %s21 = scalar_select %p18, %s19, %s20
    %p24 = pneg %p18
    %p25 = scmp.eq.s32.totalorder %s9, 7
    %p26 = por %p24, %p25
    %p27 = scmp.ne.s32.totalorder %s19, %s22
    %p28 = scmp.eq.s32.totalorder %s9, 0
    %p29 = por %p27, %p28
    %p30 = scmp.ne.s32.totalorder %s19, %s22
    %p31 = scmp.eq.s32.totalorder %s14, 7
    %p32 = por %p30, %p31
    %p33 = scmp.ne.s32.totalorder %s22, %s23
    %p34 = scmp.eq.s32.totalorder %s14, 0
    %p35 = por %p33, %p34
    %p36 = scmp.ne.s32.totalorder %s22, %s23
    %p37 = scmp.eq.s32.totalorder %s15, 7
    %p38 = por %p36, %p37
    %p40 = scmp.ne.s32.totalorder %s23, %s39
    %p41 = scmp.eq.s32.totalorder %s15, 0
    %p42 = por %p40, %p41
    %s44 = sadd.s32 %s43, 1
    %p47 = scmp.eq.s32.totalorder %s9, 7
    %p48 = scmp.ne.s32.totalorder %s43, %s45
    %p49 = scmp.eq.s32.totalorder %s9, 0
    %p50 = por %p48, %p49
    %p51 = scmp.ne.s32.totalorder %s43, %s45
    %p52 = scmp.eq.s32.totalorder %s14, 7
    %p53 = por %p51, %p52
    %p54 = scmp.ne.s32.totalorder %s45, %s46
    %p55 = scmp.eq.s32.totalorder %s14, 0
    %p56 = por %p54, %p55
    %p57 = scmp.ne.s32.totalorder %s45, %s46
    %p58 = scmp.eq.s32.totalorder %s15, 7
    %p59 = por %p57, %p58
    %p61 = scmp.ne.s32.totalorder %s46, %s60
    %p62 = scmp.eq.s32.totalorder %s15, 0
    %p63 = por %p61, %p62
    %s65 = sadd.s32 %s64, 1
    %p68 = scmp.eq.s32.totalorder %s9, 7
    %p69 = scmp.ne.s32.totalorder %s64, %s66
    %p70 = scmp.eq.s32.totalorder %s9, 0
    %p71 = por %p69, %p70
    %p72 = scmp.ne.s32.totalorder %s64, %s66
    %p73 = scmp.eq.s32.totalorder %s14, 7
    %p74 = por %p72, %p73
    %p75 = scmp.ne.s32.totalorder %s66, %s67
    %p76 = scmp.eq.s32.totalorder %s14, 0
    %p77 = por %p75, %p76
    %p78 = scmp.ne.s32.totalorder %s66, %s67
    %p79 = scmp.eq.s32.totalorder %s15, 7
    %p80 = por %p78, %p79
    %p82 = scmp.ne.s32.totalorder %s67, %s81
    %p83 = scmp.eq.s32.totalorder %s15, 0
    %p84 = por %p82, %p83
    %s85 = ssub.s32 %s9, %s16
    %p86 = scmp.eq.s32.totalorder %s85, 0
    %s88 = sadd.s32 %s87, 1
    %s89 = scalar_select %p86, %s87, %s88
    %p92 = pneg %p86
    %p93 = scmp.eq.s32.totalorder %s9, 7
    %p94 = por %p92, %p93
    %p95 = scmp.ne.s32.totalorder %s87, %s90
    %p96 = scmp.eq.s32.totalorder %s9, 0
    %p97 = por %p95, %p96
    %p98 = scmp.ne.s32.totalorder %s87, %s90
    %p99 = scmp.eq.s32.totalorder %s14, 7
    %p100 = por %p98, %p99
    %p101 = scmp.ne.s32.totalorder %s90, %s91
    %p102 = scmp.eq.s32.totalorder %s14, 0
    %p103 = por %p101, %p102
    %p104 = scmp.ne.s32.totalorder %s90, %s91
    %p105 = scmp.eq.s32.totalorder %s15, 7
    %p106 = por %p104, %p105
    %p108 = scmp.ne.s32.totalorder %s91, %s107
    %p109 = scmp.eq.s32.totalorder %s15, 0
    %p110 = por %p108, %p109
    %p111 = scmp.le.s32.totalorder 1, %s9
    %p112 = scmp.lt.s32.totalorder %s9, 9
    %p113 = pnand %p111, %p112
    %p114 = pneg %p113
    // Predicated region
    $region9: #{with_bias_layernorm.1} parent=5 // pred_check
      _
    $region10: #{with_bias_layernorm.1} parent=5 // pred_check_branch
      %116 = sbr.rel (%p113) target = $region12
    $region11: #{with_bias_layernorm.1} parent=5 // pred_region
      %s117 = ssub.s32 %s9, 1
      // Predicated region
      $region13: #{with_bias_layernorm.1} parent=11 // pred_check
        %p118 = pneg %p56
      $region14: #{with_bias_layernorm.1} parent=11 // pred_check_branch
        %120 = sbr.rel (%p118) target = $region16
      $region15: #{with_bias_layernorm.1} parent=11 // pred_region
        _
      $region16: #{with_bias_layernorm.1} parent=11 // pred_fallthru
        _
      // Predicated region
      $region17: #{with_bias_layernorm.1} parent=11 // pred_check
        %p121 = pneg %p77
      $region18: #{with_bias_layernorm.1} parent=11 // pred_check_branch
        %123 = sbr.rel (%p121) target = $region20
      $region19: #{with_bias_layernorm.1} parent=11 // pred_region
        _
      $region20: #{with_bias_layernorm.1} parent=11 // pred_fallthru
        _
    $region12: #{with_bias_layernorm.1} parent=5 // pred_fallthru
      _
    %p124 = scmp.lt.s32.totalorder %s9, 8
    // Predicated region
    $region21: #{with_bias_layernorm.1} parent=5 // pred_check
      %p125 = pneg %p124
    $region22: #{with_bias_layernorm.1} parent=5 // pred_check_branch
      %127 = sbr.rel (%p125) target = $region24
    $region23: #{with_bias_layernorm.1} parent=5 // pred_region
      // Predicated region
      $region25: #{with_bias_layernorm.1} parent=23 // pred_check
        %p128 = pneg %p29
      $region26: #{with_bias_layernorm.1} parent=23 // pred_check_branch
        %130 = sbr.rel (%p128) target = $region28
      $region27: #{with_bias_layernorm.1} parent=23 // pred_region
        %s131 = smul.u32 8, %s9
        %p132 = scmp.lt.s32.totalorder %s131, 63
        %s133 = scalar_select %p132, %s131, 63
        %s134 = smul.addr %s133, 8
        %s135 = scalar_lea.vmem %s0, %s134
        %s136 = smul.u32 8, %s9
      $region28: #{with_bias_layernorm.1} parent=23 // pred_fallthru
        _
    $region24: #{with_bias_layernorm.1} parent=5 // pred_fallthru
      _
    %p137 = scmp.le.s32.totalorder 1, %s9
    %p138 = scmp.lt.s32.totalorder %s9, 9
    %p139 = pnand %p137, %p138
    %p140 = pneg %p139
    // Predicated region
    $region29: #{with_bias_layernorm.1} parent=5 // pred_check
      _
    $region30: #{with_bias_layernorm.1} parent=5 // pred_check_branch
      %142 = sbr.rel (%p139) target = $region32
    $region31: #{with_bias_layernorm.1} parent=5 // pred_region
      %s143 = ssub.s32 %s9, 1
      %s144 = smul.u32 8, %s14
      %p145 = scmp.lt.s32.totalorder %s144, 63
      %s146 = scalar_select %p145, %s144, 63
      %s147 = smul.addr %s146, 8
      %s148 = scalar_lea.vmem %s0, %s147
      %p149 = pneg %p35
      %p150 = pneg %p32
      %p151 = pneg %p56
      %p152 = pneg %p53
      %p153 = pneg %p77
      %p154 = pneg %p74
      %p155 = pneg %p103
      %p156 = pneg %p100
      %s157 = smul.u32 8, %s14
      %p158 = scmp.lt.s32.totalorder %s157, 63
      %s159 = scalar_select %p158, %s157, 63
      %s160 = smul.addr %s159, 8
      %s161 = scalar_lea.vmem %s3, %s160
      %s162 = smul.u32 8, %s14
      %p163 = scmp.lt.s32.totalorder %s162, 63
      %s164 = scalar_select %p163, %s162, 63
      %s165 = smul.addr %s164, 8
      %s166 = scalar_lea.vmem %s0, %s165
      %s167 = smul.u32 8, %s14
      %s168 = smul.u32 8, %s14
      %p169 = scmp.lt.s32.totalorder %s168, 63
      %s170 = scalar_select %p169, %s168, 63
      %s171 = smul.addr %s170, 8
      %s172 = scalar_lea.vmem %s3, %s171
      %s173 = smul.u32 8, %s14
      %v174 = vld [vmem:[%s166] sm:$0xff]
      %v175 = vld [vmem:[%s166 + $0x8] sm:$0xff]
      %v176 = vld [vmem:[%s166 + $0x10] sm:$0xff]
      %v177 = vld [vmem:[%s166 + $0x18] sm:$0xff]
      %v178 = vld [vmem:[%s166 + $0x20] sm:$0xff]
      %v179 = vld [vmem:[%s166 + $0x28] sm:$0xff]
      %v180 = vld [vmem:[%s166 + $0x30] sm:$0xff]
      %v181 = vld [vmem:[%s166 + $0x38] sm:$0xff]
      %vm182 = vcmask 392192
      %v184 = vsel %vm182, %v174, 0
      %v187 = vsel %vm182, %v175, 0
      %v190 = vsel %vm182, %v176, 0
      %v193 = vsel %vm182, %v177, 0
      %v196 = vsel %vm182, %v178, 0
      %v199 = vsel %vm182, %v179, 0
      %v202 = vsel %vm182, %v180, 0
      %v205 = vsel %vm182, %v181, 0
      %207 = vmatprep.subr.mxu0 0.0
      %208 = vmatpush1.msra.mxu0 1.0
      %209 = vmatprep.subr.mxu0 0.0
      %210 = vmatpush1.msra.mxu0 1.0
      %211 = vmatprep.subr.mxu0 0.0
      %212 = vmatpush1.msra.mxu0 1.0
      %213 = vmatprep.subr.mxu0 0.0
      %214 = vmatpush1.msra.mxu0 1.0
      %215 = vmatprep.subr.mxu0 0.0
      %216 = vmatpush1.msra.mxu0 1.0
      %217 = vmatprep.subr.mxu0 0.0
      %218 = vmatpush1.msra.mxu0 1.0
      %219 = vmatprep.subr.mxu0 0.0
      %220 = vmatpush1.msra.mxu0 0.0
      %221 = vmatprep.subr.mxu0 0.0
      %222 = vmatpush1.msra.mxu0 0.0
      %223 = vmatprep.subr.mxu0 0.0
      %224 = vmatpush1.msra.mxu0 0.0
      %225 = vmatprep.subr.mxu0 0.0
      %226 = vmatpush1.msra.mxu0 0.0
      %227 = vmatprep.subr.mxu0 0.0
      %228 = vmatpush1.msra.mxu0 0.0
      %229 = vmatprep.subr.mxu0 0.0
      %230 = vmatpush1.msra.mxu0 0.0
      %231 = vmatprep.subr.mxu0 0.0
      %232 = vmatpush1.msra.mxu0 0.0
      %233 = vmatprep.subr.mxu0 0.0
      %234 = vmatpush1.msra.mxu0 0.0
      %235 = vmatprep.subr.mxu0 0.0
      %236 = vmatpush1.msra.mxu0 0.0
      %237 = vmatprep.subr.mxu0 0.0
      %238 = vmatpush1.msra.mxu0 0.0
      %239 = vmatprep.subr.mxu0 0.0
      %240 = vmatpush1.msra.mxu0 0.0
      %241 = vmatprep.subr.mxu0 0.0
      %242 = vmatpush1.msra.mxu0 0.0
      %243 = vmatprep.subr.mxu0 0.0
      %244 = vmatpush1.msra.mxu0 0.0
      %245 = vmatprep.subr.mxu0 0.0
      %246 = vmatpush1.msra.mxu0 0.0
      %247 = vmatprep.subr.mxu0 0.0
      %248 = vmatpush1.msra.mxu0 0.0
      %249 = vmatprep.subr.mxu0 0.0
      %250 = vmatpush1.msra.mxu0 0.0
      %251 = vmatprep.subr.mxu0 0.0
      %252 = vmatpush1.msra.mxu0 0.0
      %253 = vmatprep.subr.mxu0 0.0
      %254 = vmatpush1.msra.mxu0 0.0
      %255 = vmatprep.subr.mxu0 0.0
      %256 = vmatpush1.msra.mxu0 0.0
      %257 = vmatprep.subr.mxu0 0.0
      %258 = vmatpush1.msra.mxu0 0.0
      %259 = vmatprep.subr.mxu0 0.0
      %260 = vmatpush1.msra.mxu0 0.0
      %261 = vmatprep.subr.mxu0 0.0
      %262 = vmatpush1.msra.mxu0 0.0
      %263 = vmatprep.subr.mxu0 0.0
      %264 = vmatpush1.msra.mxu0 0.0
      %265 = vmatprep.subr.mxu0 0.0
      %266 = vmatpush1.msra.mxu0 0.0
      %267 = vmatprep.subr.mxu0 0.0
      %268 = vmatpush1.msra.mxu0 0.0
      %269 = vmatprep.subr.mxu0 0.0
      %270 = vmatpush1.msra.mxu0 0.0
      %271 = vmatprep.mubr.f32.mxu0 0.0
      %v272 = vand.u32 %v184, 4294901760
      %v273 = vsub.f32 %v184, %v272
      %v274 = vand.u32 %v273, 4294901760
      %v275 = vsub.f32 %v273, %v274
      %v276 = vand.u32 %v275, 4294901760
      %277 = vmatmul.mubr.f32.gmra.mrb[0].mxu0 %v276
      %v278 = vpop.f32.mrb[0].mxu0
      %v279 = vadd.f32 0.0, %v278
      %v280 = vpop.f32.mrb[0].mxu0
      %281 = vmatprep.mubr.f32.mxu0 0.0
      %v282 = vand.u32 %v187, 4294901760
      %v283 = vsub.f32 %v187, %v282
      %v284 = vand.u32 %v283, 4294901760
      %v285 = vsub.f32 %v283, %v284
      %v286 = vand.u32 %v285, 4294901760
      %287 = vmatmul.mubr.f32.gmra.mrb[0].mxu0 %v286
      %v288 = vpop.f32.mrb[0].mxu0
      %v289 = vadd.f32 0.0, %v288
      %v290 = vpop.f32.mrb[0].mxu0
      %291 = vmatprep.mubr.f32.mxu0 0.0
      %v292 = vand.u32 %v190, 4294901760
      %v293 = vsub.f32 %v190, %v292
      %v294 = vand.u32 %v293, 4294901760
      %v295 = vsub.f32 %v293, %v294
      %v296 = vand.u32 %v295, 4294901760
      %297 = vmatmul.mubr.f32.gmra.mrb[0].mxu0 %v296
      %v298 = vpop.f32.mrb[0].mxu0
      %v299 = vadd.f32 0.0, %v298
      %v300 = vpop.f32.mrb[0].mxu0
      %301 = vmatprep.mubr.f32.mxu0 0.0
      %v302 = vand.u32 %v193, 4294901760
      %v303 = vsub.f32 %v193, %v302
      %v304 = vand.u32 %v303, 4294901760
      %v305 = vsub.f32 %v303, %v304
      %v306 = vand.u32 %v305, 4294901760
      %307 = vmatmul.mubr.f32.gmra.mrb[0].mxu0 %v306
      %v308 = vpop.f32.mrb[0].mxu0
      %v309 = vadd.f32 0.0, %v308
      %v310 = vpop.f32.mrb[0].mxu0
      %311 = vmatprep.mubr.f32.mxu0 0.0
      %v312 = vand.u32 %v196, 4294901760
      %v313 = vsub.f32 %v196, %v312
      %v314 = vand.u32 %v313, 4294901760
      %v315 = vsub.f32 %v313, %v314
      %v316 = vand.u32 %v315, 4294901760
      %317 = vmatmul.mubr.f32.gmra.mrb[0].mxu0 %v316
      %v318 = vpop.f32.mrb[0].mxu0
      %v319 = vadd.f32 0.0, %v318
      %v320 = vpop.f32.mrb[0].mxu0
      %321 = vmatprep.mubr.f32.mxu0 0.0
      %v322 = vand.u32 %v199, 4294901760
      %v323 = vsub.f32 %v199, %v322
      %v324 = vand.u32 %v323, 4294901760
      %v325 = vsub.f32 %v323, %v324
      %v326 = vand.u32 %v325, 4294901760
      %327 = vmatmul.mubr.f32.gmra.mrb[0].mxu0 %v326
      %v328 = vpop.f32.mrb[0].mxu0
      %v329 = vadd.f32 0.0, %v328
      %v330 = vpop.f32.mrb[0].mxu0
      %331 = vmatprep.mubr.f32.mxu0 0.0
      %v332 = vand.u32 %v202, 4294901760
      %v333 = vsub.f32 %v202, %v332
      %v334 = vand.u32 %v333, 4294901760
      %v335 = vsub.f32 %v333, %v334
      %v336 = vand.u32 %v335, 4294901760
      %337 = vmatmul.mubr.f32.gmra.mrb[0].mxu0 %v336
      %v338 = vpop.f32.mrb[0].mxu0
      %v339 = vadd.f32 0.0, %v338
      %v340 = vpop.f32.mrb[0].mxu0
      %341 = vmatprep.mubr.f32.mxu0 0.0
      %v342 = vand.u32 %v205, 4294901760
      %v343 = vsub.f32 %v205, %v342
      %v344 = vand.u32 %v343, 4294901760
      %v345 = vsub.f32 %v343, %v344
      %v346 = vand.u32 %v345, 4294901760
      %347 = vmatmul.mubr.f32.gmra.mrb[0].mxu0 %v346
      %v348 = vpop.f32.mrb[0].mxu0
      %v349 = vadd.f32 0.0, %v348
      %v350 = vpop.f32.mrb[0].mxu0
      %351 = vdwg.mxu0
      %352 = vmatprep.subr.mxu0 0.0
      %353 = vmatpush1.msra.mxu0 0.0
      %354 = vmatprep.subr.mxu0 0.0
      %355 = vmatpush1.msra.mxu0 0.0
      %356 = vmatprep.subr.mxu0 0.0
      %357 = vmatpush1.msra.mxu0 0.0
      %358 = vmatprep.subr.mxu0 0.0
      %359 = vmatpush1.msra.mxu0 0.0
      %360 = vmatprep.subr.mxu0 0.0
      %361 = vmatpush1.msra.mxu0 0.0
      %362 = vmatprep.subr.mxu0 0.0
      %363 = vmatpush1.msra.mxu0 0.0
      %364 = vmatprep.subr.mxu0 0.0
      %365 = vmatpush1.msra.mxu0 0.0
      %366 = vmatprep.subr.mxu0 0.0
      %367 = vmatpush1.msra.mxu0 0.0
      %368 = vmatprep.subr.mxu0 0.0
      %369 = vmatpush1.msra.mxu0 0.0
      %370 = vmatprep.subr.mxu0 0.0
      %371 = vmatpush1.msra.mxu0 0.0
      %372 = vmatprep.subr.mxu0 0.0
      %373 = vmatpush1.msra.mxu0 0.0
      %374 = vmatprep.subr.mxu0 0.0
      %375 = vmatpush1.msra.mxu0 0.0
      %376 = vmatprep.subr.mxu0 0.0
      %377 = vmatpush1.msra.mxu0 0.0
      %378 = vmatprep.subr.mxu0 0.0
      %379 = vmatpush1.msra.mxu0 0.0
      %380 = vmatprep.subr.mxu0 0.0
      %381 = vmatpush1.msra.mxu0 0.0
      %382 = vmatprep.subr.mxu0 0.0
      %383 = vmatpush1.msra.mxu0 0.0
      %384 = vmatprep.subr.mxu0 0.0
      %385 = vmatpush1.msra.mxu0 0.0
      %386 = vmatprep.subr.mxu0 0.0
      %387 = vmatpush1.msra.mxu0 0.0
      %388 = vmatprep.subr.mxu0 0.0
      %389 = vmatpush1.msra.mxu0 0.0
      %390 = vmatprep.subr.mxu0 0.0
      %391 = vmatpush1.msra.mxu0 0.0
      %392 = vmatprep.subr.mxu0 0.0
      %393 = vmatpush1.msra.mxu0 0.0
      %394 = vmatprep.subr.mxu0 0.0
      %395 = vmatpush1.msra.mxu0 0.0
      %396 = vmatprep.subr.mxu0 0.0
      %397 = vmatpush1.msra.mxu0 0.0
      %398 = vmatprep.subr.mxu0 0.0
      %399 = vmatpush1.msra.mxu0 0.0
      %400 = vmatprep.subr.mxu0 0.0
      %401 = vmatpush1.msra.mxu0 0.0
      %402 = vmatprep.subr.mxu0 0.0
      %403 = vmatpush1.msra.mxu0 0.0
      %404 = vmatprep.subr.mxu0 0.0
      %405 = vmatpush1.msra.mxu0 0.0
      %406 = vmatprep.subr.mxu0 0.0
      %407 = vmatpush1.msra.mxu0 0.0
      %408 = vmatprep.subr.mxu0 0.0
      %409 = vmatpush1.msra.mxu0 0.0
      %410 = vmatprep.subr.mxu0 0.0
      %411 = vmatpush1.msra.mxu0 0.0
      %412 = vmatprep.subr.mxu0 0.0
      %413 = vmatpush1.msra.mxu0 0.0
      %414 = vmatprep.subr.mxu0 0.0
      %415 = vmatpush1.msra.mxu0 0.0
      %416 = vmatprep.mubr.f32.mxu0 0.0
      %v417 = vand.u32 %v184, 4294901760
      %418 = vmatmul.mubr.f32.gmra.mrb[0].mxu0 %v417
      %v419 = vpop.f32.mrb[0].mxu0
      %v420 = vadd.f32 %v279, %v419
      %v421 = vpop.f32.mrb[0].mxu0
      %422 = vmatprep.mubr.f32.mxu0 0.0
      %v423 = vand.u32 %v187, 4294901760
      %424 = vmatmul.mubr.f32.gmra.mrb[0].mxu0 %v423
      %v425 = vpop.f32.mrb[0].mxu0
      %v426 = vadd.f32 %v289, %v425
      %v427 = vpop.f32.mrb[0].mxu0
      %428 = vmatprep.mubr.f32.mxu0 0.0
      %v429 = vand.u32 %v190, 4294901760
      %430 = vmatmul.mubr.f32.gmra.mrb[0].mxu0 %v429
      %v431 = vpop.f32.mrb[0].mxu0
      %v432 = vadd.f32 %v299, %v431
      %v433 = vpop.f32.mrb[0].mxu0
      %434 = vmatprep.mubr.f32.mxu0 0.0
      %v435 = vand.u32 %v193, 4294901760
      %436 = vmatmul.mubr.f32.gmra.mrb[0].mxu0 %v435
      %v437 = vpop.f32.mrb[0].mxu0
      %v438 = vadd.f32 %v309, %v437
      %v439 = vpop.f32.mrb[0].mxu0
      %440 = vmatprep.mubr.f32.mxu0 0.0
      %v441 = vand.u32 %v196, 4294901760
      %442 = vmatmul.mubr.f32.gmra.mrb[0].mxu0 %v441
      %v443 = vpop.f32.mrb[0].mxu0
      %v444 = vadd.f32 %v319, %v443
      %v445 = vpop.f32.mrb[0].mxu0
      %446 = vmatprep.mubr.f32.mxu0 0.0
      %v447 = vand.u32 %v199, 4294901760
      %448 = vmatmul.mubr.f32.gmra.mrb[0].mxu0 %v447
      %v449 = vpop.f32.mrb[0].mxu0
      %v450 = vadd.f32 %v329, %v449
      %v451 = vpop.f32.mrb[0].mxu0
      %452 = vmatprep.mubr.f32.mxu0 0.0
      %v453 = vand.u32 %v202, 4294901760
      %454 = vmatmul.mubr.f32.gmra.mrb[0].mxu0 %v453
      %v455 = vpop.f32.mrb[0].mxu0
      %v456 = vadd.f32 %v339, %v455
      %v457 = vpop.f32.mrb[0].mxu0
      %458 = vmatprep.mubr.f32.mxu0 0.0
      %v459 = vand.u32 %v205, 4294901760
      %460 = vmatmul.mubr.f32.gmra.mrb[0].mxu0 %v459
      %v461 = vpop.f32.mrb[0].mxu0
      %v462 = vadd.f32 %v349, %v461
      %v463 = vpop.f32.mrb[0].mxu0
      %464 = vdwg.mxu0
      %465 = vmatprep.subr.mxu0 0.0
      %466 = vmatpush1.msra.mxu0 0.0
      %467 = vmatprep.subr.mxu0 0.0
      %468 = vmatpush1.msra.mxu0 0.0
      %469 = vmatprep.subr.mxu0 0.0
      %470 = vmatpush1.msra.mxu0 0.0
      %471 = vmatprep.subr.mxu0 0.0
      %472 = vmatpush1.msra.mxu0 0.0
      %473 = vmatprep.subr.mxu0 0.0
      %474 = vmatpush1.msra.mxu0 0.0
      %475 = vmatprep.subr.mxu0 0.0
      %476 = vmatpush1.msra.mxu0 0.0
      %477 = vmatprep.subr.mxu0 0.0
      %478 = vmatpush1.msra.mxu0 0.0
      %479 = vmatprep.subr.mxu0 0.0
      %480 = vmatpush1.msra.mxu0 0.0
      %481 = vmatprep.subr.mxu0 0.0
      %482 = vmatpush1.msra.mxu0 0.0
      %483 = vmatprep.subr.mxu0 0.0
      %484 = vmatpush1.msra.mxu0 0.0
      %485 = vmatprep.subr.mxu0 0.0
      %486 = vmatpush1.msra.mxu0 0.0
      %487 = vmatprep.subr.mxu0 0.0
      %488 = vmatpush1.msra.mxu0 0.0
      %489 = vmatprep.subr.mxu0 0.0
      %490 = vmatpush1.msra.mxu0 0.0
      %491 = vmatprep.subr.mxu0 0.0
      %492 = vmatpush1.msra.mxu0 0.0
      %493 = vmatprep.subr.mxu0 0.0
      %494 = vmatpush1.msra.mxu0 0.0
      %495 = vmatprep.subr.mxu0 0.0
      %496 = vmatpush1.msra.mxu0 0.0
      %497 = vmatprep.subr.mxu0 0.0
      %498 = vmatpush1.msra.mxu0 0.0
      %499 = vmatprep.subr.mxu0 0.0
      %500 = vmatpush1.msra.mxu0 0.0
      %501 = vmatprep.subr.mxu0 0.0
      %502 = vmatpush1.msra.mxu0 0.0
      %503 = vmatprep.subr.mxu0 0.0
      %504 = vmatpush1.msra.mxu0 0.0
      %505 = vmatprep.subr.mxu0 0.0
      %506 = vmatpush1.msra.mxu0 0.0
      %507 = vmatprep.subr.mxu0 0.0
      %508 = vmatpush1.msra.mxu0 0.0
      %509 = vmatprep.subr.mxu0 0.0
      %510 = vmatpush1.msra.mxu0 0.0
      %511 = vmatprep.subr.mxu0 0.0
      %512 = vmatpush1.msra.mxu0 0.0
      %513 = vmatprep.subr.mxu0 0.0
      %514 = vmatpush1.msra.mxu0 0.0
      %515 = vmatprep.subr.mxu0 0.0
      %516 = vmatpush1.msra.mxu0 0.0
      %517 = vmatprep.subr.mxu0 0.0
      %518 = vmatpush1.msra.mxu0 0.0
      %519 = vmatprep.subr.mxu0 0.0
      %520 = vmatpush1.msra.mxu0 0.0
      %521 = vmatprep.subr.mxu0 0.0
      %522 = vmatpush1.msra.mxu0 0.0
      %523 = vmatprep.subr.mxu0 0.0
      %524 = vmatpush1.msra.mxu0 0.0
      %525 = vmatprep.subr.mxu0 0.0
      %526 = vmatpush1.msra.mxu0 0.0
      %527 = vmatprep.subr.mxu0 0.0
      %528 = vmatpush1.msra.mxu0 0.0
      %529 = vmatprep.mubr.f32.mxu0 0.0
      %v530 = vand.u32 %v184, 4294901760
      %v531 = vsub.f32 %v184, %v530
      %532 = vmatmul.mubr.f32.gmra.mrb[0].mxu0 %v531
      %v533 = vpop.f32.mrb[0].mxu0
      %v534 = vadd.f32 %v420, %v533
      %v535 = vpop.f32.mrb[0].mxu0
      %536 = vmatprep.mubr.f32.mxu0 0.0
      %v537 = vand.u32 %v187, 4294901760
      %v538 = vsub.f32 %v187, %v537
      %539 = vmatmul.mubr.f32.gmra.mrb[0].mxu0 %v538
      %v540 = vpop.f32.mrb[0].mxu0
      %v541 = vadd.f32 %v426, %v540
      %v542 = vpop.f32.mrb[0].mxu0
      %543 = vmatprep.mubr.f32.mxu0 0.0
      %v544 = vand.u32 %v190, 4294901760
      %v545 = vsub.f32 %v190, %v544
      %546 = vmatmul.mubr.f32.gmra.mrb[0].mxu0 %v545
      %v547 = vpop.f32.mrb[0].mxu0
      %v548 = vadd.f32 %v432, %v547
      %v549 = vpop.f32.mrb[0].mxu0
      %550 = vmatprep.mubr.f32.mxu0 0.0
      %v551 = vand.u32 %v193, 4294901760
      %v552 = vsub.f32 %v193, %v551
      %553 = vmatmul.mubr.f32.gmra.mrb[0].mxu0 %v552
      %v554 = vpop.f32.mrb[0].mxu0
      %v555 = vadd.f32 %v438, %v554
      %v556 = vpop.f32.mrb[0].mxu0
      %557 = vmatprep.mubr.f32.mxu0 0.0
      %v558 = vand.u32 %v196, 4294901760
      %v559 = vsub.f32 %v196, %v558
      %560 = vmatmul.mubr.f32.gmra.mrb[0].mxu0 %v559
      %v561 = vpop.f32.mrb[0].mxu0
      %v562 = vadd.f32 %v444, %v561
      %v563 = vpop.f32.mrb[0].mxu0
      %564 = vmatprep.mubr.f32.mxu0 0.0
      %v565 = vand.u32 %v199, 4294901760
      %v566 = vsub.f32 %v199, %v565
      %567 = vmatmul.mubr.f32.gmra.mrb[0].mxu0 %v566
      %v568 = vpop.f32.mrb[0].mxu0
      %v569 = vadd.f32 %v450, %v568
      %v570 = vpop.f32.mrb[0].mxu0
      %571 = vmatprep.mubr.f32.mxu0 0.0
      %v572 = vand.u32 %v202, 4294901760
      %v573 = vsub.f32 %v202, %v572
      %574 = vmatmul.mubr.f32.gmra.mrb[0].mxu0 %v573
      %v575 = vpop.f32.mrb[0].mxu0
      %v576 = vadd.f32 %v456, %v575
      %v577 = vpop.f32.mrb[0].mxu0
      %578 = vmatprep.mubr.f32.mxu0 0.0
      %v579 = vand.u32 %v205, 4294901760
      %v580 = vsub.f32 %v205, %v579
      %581 = vmatmul.mubr.f32.gmra.mrb[0].mxu0 %v580
      %v582 = vpop.f32.mrb[0].mxu0
      %v583 = vadd.f32 %v462, %v582
      %v584 = vpop.f32.mrb[0].mxu0
      %585 = vdwg.mxu0
      %586 = vmatprep.subr.mxu0 0.0
      %587 = vmatpush1.msra.mxu0 1.0
      %588 = vmatprep.subr.mxu0 0.0
      %589 = vmatpush1.msra.mxu0 1.0
      %590 = vmatprep.subr.mxu0 0.0
      %591 = vmatpush1.msra.mxu0 1.0
      %592 = vmatprep.subr.mxu0 0.0
      %593 = vmatpush1.msra.mxu0 1.0
      %594 = vmatprep.subr.mxu0 0.0
      %595 = vmatpush1.msra.mxu0 1.0
      %596 = vmatprep.subr.mxu0 0.0
      %597 = vmatpush1.msra.mxu0 1.0
      %598 = vmatprep.subr.mxu0 0.0
      %599 = vmatpush1.msra.mxu0 0.0
      %600 = vmatprep.subr.mxu0 0.0
      %601 = vmatpush1.msra.mxu0 0.0
      %602 = vmatprep.subr.mxu0 0.0
      %603 = vmatpush1.msra.mxu0 0.0
      %604 = vmatprep.subr.mxu0 0.0
      %605 = vmatpush1.msra.mxu0 0.0
      %606 = vmatprep.subr.mxu0 0.0
      %607 = vmatpush1.msra.mxu0 0.0
      %608 = vmatprep.subr.mxu0 0.0
      %609 = vmatpush1.msra.mxu0 0.0
      %610 = vmatprep.subr.mxu0 0.0
      %611 = vmatpush1.msra.mxu0 0.0
      %612 = vmatprep.subr.mxu0 0.0
      %613 = vmatpush1.msra.mxu0 0.0
      %614 = vmatprep.subr.mxu0 0.0
      %615 = vmatpush1.msra.mxu0 0.0
      %616 = vmatprep.subr.mxu0 0.0
      %617 = vmatpush1.msra.mxu0 0.0
      %618 = vmatprep.subr.mxu0 0.0
      %619 = vmatpush1.msra.mxu0 0.0
      %620 = vmatprep.subr.mxu0 0.0
      %621 = vmatpush1.msra.mxu0 0.0
      %622 = vmatprep.subr.mxu0 0.0
      %623 = vmatpush1.msra.mxu0 0.0
      %624 = vmatprep.subr.mxu0 0.0
      %625 = vmatpush1.msra.mxu0 0.0
      %626 = vmatprep.subr.mxu0 0.0
      %627 = vmatpush1.msra.mxu0 0.0
      %628 = vmatprep.subr.mxu0 0.0
      %629 = vmatpush1.msra.mxu0 0.0
      %630 = vmatprep.subr.mxu0 0.0
      %631 = vmatpush1.msra.mxu0 0.0
      %632 = vmatprep.subr.mxu0 0.0
      %633 = vmatpush1.msra.mxu0 0.0
      %634 = vmatprep.subr.mxu0 0.0
      %635 = vmatpush1.msra.mxu0 0.0
      %636 = vmatprep.subr.mxu0 0.0
      %637 = vmatpush1.msra.mxu0 0.0
      %638 = vmatprep.subr.mxu0 0.0
      %639 = vmatpush1.msra.mxu0 0.0
      %640 = vmatprep.subr.mxu0 0.0
      %641 = vmatpush1.msra.mxu0 0.0
      %642 = vmatprep.subr.mxu0 0.0
      %643 = vmatpush1.msra.mxu0 0.0
      %644 = vmatprep.subr.mxu0 0.0
      %645 = vmatpush1.msra.mxu0 0.0
      %646 = vmatprep.subr.mxu0 0.0
      %647 = vmatpush1.msra.mxu0 0.0
      %648 = vmatprep.subr.mxu0 0.0
      %649 = vmatpush1.msra.mxu0 0.0
      %650 = vmatprep.mubr.f32.mxu0 0.0
      %v651 = vand.u32 %v184, 4294901760
      %v652 = vsub.f32 %v184, %v651
      %v653 = vand.u32 %v652, 4294901760
      %654 = vmatmul.mubr.f32.gmra.mrb[0].mxu0 %v653
      %v655 = vpop.f32.mrb[0].mxu0
      %v656 = vadd.f32 %v534, %v655
      %v657 = vpop.f32.mrb[0].mxu0
      %658 = vmatprep.mubr.f32.mxu0 0.0
      %v659 = vand.u32 %v187, 4294901760
      %v660 = vsub.f32 %v187, %v659
      %v661 = vand.u32 %v660, 4294901760
      %662 = vmatmul.mubr.f32.gmra.mrb[0].mxu0 %v661
      %v663 = vpop.f32.mrb[0].mxu0
      %v664 = vadd.f32 %v541, %v663
      %v665 = vpop.f32.mrb[0].mxu0
      %666 = vmatprep.mubr.f32.mxu0 0.0
      %v667 = vand.u32 %v190, 4294901760
      %v668 = vsub.f32 %v190, %v667
      %v669 = vand.u32 %v668, 4294901760
      %670 = vmatmul.mubr.f32.gmra.mrb[0].mxu0 %v669
      %v671 = vpop.f32.mrb[0].mxu0
      %v672 = vadd.f32 %v548, %v671
      %v673 = vpop.f32.mrb[0].mxu0
      %674 = vmatprep.mubr.f32.mxu0 0.0
      %v675 = vand.u32 %v193, 4294901760
      %v676 = vsub.f32 %v193, %v675
      %v677 = vand.u32 %v676, 4294901760
      %678 = vmatmul.mubr.f32.gmra.mrb[0].mxu0 %v677
      %v679 = vpop.f32.mrb[0].mxu0
      %v680 = vadd.f32 %v555, %v679
      %v681 = vpop.f32.mrb[0].mxu0
      %682 = vmatprep.mubr.f32.mxu0 0.0
      %v683 = vand.u32 %v196, 4294901760
      %v684 = vsub.f32 %v196, %v683
      %v685 = vand.u32 %v684, 4294901760
      %686 = vmatmul.mubr.f32.gmra.mrb[0].mxu0 %v685
      %v687 = vpop.f32.mrb[0].mxu0
      %v688 = vadd.f32 %v562, %v687
      %v689 = vpop.f32.mrb[0].mxu0
      %690 = vmatprep.mubr.f32.mxu0 0.0
      %v691 = vand.u32 %v199, 4294901760
      %v692 = vsub.f32 %v199, %v691
      %v693 = vand.u32 %v692, 4294901760
      %694 = vmatmul.mubr.f32.gmra.mrb[0].mxu0 %v693
      %v695 = vpop.f32.mrb[0].mxu0
      %v696 = vadd.f32 %v569, %v695
      %v697 = vpop.f32.mrb[0].mxu0
      %698 = vmatprep.mubr.f32.mxu0 0.0
      %v699 = vand.u32 %v202, 4294901760
      %v700 = vsub.f32 %v202, %v699
      %v701 = vand.u32 %v700, 4294901760
      %702 = vmatmul.mubr.f32.gmra.mrb[0].mxu0 %v701
      %v703 = vpop.f32.mrb[0].mxu0
      %v704 = vadd.f32 %v576, %v703
      %v705 = vpop.f32.mrb[0].mxu0
      %706 = vmatprep.mubr.f32.mxu0 0.0
      %v707 = vand.u32 %v205, 4294901760
      %v708 = vsub.f32 %v205, %v707
      %v709 = vand.u32 %v708, 4294901760
      %710 = vmatmul.mubr.f32.gmra.mrb[0].mxu0 %v709
      %v711 = vpop.f32.mrb[0].mxu0
      %v712 = vadd.f32 %v583, %v711
      %v713 = vpop.f32.mrb[0].mxu0
      %714 = vdwg.mxu0
      %715 = vmatprep.subr.mxu0 0.0
      %716 = vmatpush1.msra.mxu0 0.0
      %717 = vmatprep.subr.mxu0 0.0
      %718 = vmatpush1.msra.mxu0 0.0
      %719 = vmatprep.subr.mxu0 0.0
      %720 = vmatpush1.msra.mxu0 0.0
      %721 = vmatprep.subr.mxu0 0.0
      %722 = vmatpush1.msra.mxu0 0.0
      %723 = vmatprep.subr.mxu0 0.0
      %724 = vmatpush1.msra.mxu0 0.0
      %725 = vmatprep.subr.mxu0 0.0
      %726 = vmatpush1.msra.mxu0 0.0
      %727 = vmatprep.subr.mxu0 0.0
      %728 = vmatpush1.msra.mxu0 0.0
      %729 = vmatprep.subr.mxu0 0.0
      %730 = vmatpush1.msra.mxu0 0.0
      %731 = vmatprep.subr.mxu0 0.0
      %732 = vmatpush1.msra.mxu0 0.0
      %733 = vmatprep.subr.mxu0 0.0
      %734 = vmatpush1.msra.mxu0 0.0
      %735 = vmatprep.subr.mxu0 0.0
      %736 = vmatpush1.msra.mxu0 0.0
      %737 = vmatprep.subr.mxu0 0.0
      %738 = vmatpush1.msra.mxu0 0.0
      %739 = vmatprep.subr.mxu0 0.0
      %740 = vmatpush1.msra.mxu0 0.0
      %741 = vmatprep.subr.mxu0 0.0
      %742 = vmatpush1.msra.mxu0 0.0
      %743 = vmatprep.subr.mxu0 0.0
      %744 = vmatpush1.msra.mxu0 0.0
      %745 = vmatprep.subr.mxu0 0.0
      %746 = vmatpush1.msra.mxu0 0.0
      %747 = vmatprep.subr.mxu0 0.0
      %748 = vmatpush1.msra.mxu0 0.0
      %749 = vmatprep.subr.mxu0 0.0
      %750 = vmatpush1.msra.mxu0 0.0
      %751 = vmatprep.subr.mxu0 0.0
      %752 = vmatpush1.msra.mxu0 0.0
      %753 = vmatprep.subr.mxu0 0.0
      %754 = vmatpush1.msra.mxu0 0.0
      %755 = vmatprep.subr.mxu0 0.0
      %756 = vmatpush1.msra.mxu0 0.0
      %757 = vmatprep.subr.mxu0 0.0
      %758 = vmatpush1.msra.mxu0 0.0
      %759 = vmatprep.subr.mxu0 0.0
      %760 = vmatpush1.msra.mxu0 0.0
      %761 = vmatprep.subr.mxu0 0.0
      %762 = vmatpush1.msra.mxu0 0.0
      %763 = vmatprep.subr.mxu0 0.0
      %764 = vmatpush1.msra.mxu0 0.0
      %765 = vmatprep.subr.mxu0 0.0
      %766 = vmatpush1.msra.mxu0 0.0
      %767 = vmatprep.subr.mxu0 0.0
      %768 = vmatpush1.msra.mxu0 0.0
      %769 = vmatprep.subr.mxu0 0.0
      %770 = vmatpush1.msra.mxu0 0.0
      %771 = vmatprep.subr.mxu0 0.0
      %772 = vmatpush1.msra.mxu0 0.0
      %773 = vmatprep.subr.mxu0 0.0
      %774 = vmatpush1.msra.mxu0 0.0
      %775 = vmatprep.subr.mxu0 0.0
      %776 = vmatpush1.msra.mxu0 0.0
      %777 = vmatprep.subr.mxu0 0.0
      %778 = vmatpush1.msra.mxu0 0.0
      %779 = vmatprep.mubr.f32.mxu0 0.0
      %v780 = vand.u32 %v184, 4294901760
      %781 = vmatmul.mubr.f32.gmra.mrb[0].mxu0 %v780
      %v782 = vpop.f32.mrb[0].mxu0
      %v783 = vadd.f32 %v656, %v782
      %v784 = vpop.f32.mrb[0].mxu0
      %785 = vmatprep.mubr.f32.mxu0 0.0
      %v786 = vand.u32 %v187, 4294901760
      %787 = vmatmul.mubr.f32.gmra.mrb[0].mxu0 %v786
      %v788 = vpop.f32.mrb[0].mxu0
      %v789 = vadd.f32 %v664, %v788
      %v790 = vpop.f32.mrb[0].mxu0
      %791 = vmatprep.mubr.f32.mxu0 0.0
      %v792 = vand.u32 %v190, 4294901760
      %793 = vmatmul.mubr.f32.gmra.mrb[0].mxu0 %v792
      %v794 = vpop.f32.mrb[0].mxu0
      %v795 = vadd.f32 %v672, %v794
      %v796 = vpop.f32.mrb[0].mxu0
      %797 = vmatprep.mubr.f32.mxu0 0.0
      %v798 = vand.u32 %v193, 4294901760
      %799 = vmatmul.mubr.f32.gmra.mrb[0].mxu0 %v798
      %v800 = vpop.f32.mrb[0].mxu0
      %v801 = vadd.f32 %v680, %v800
      %v802 = vpop.f32.mrb[0].mxu0
      %803 = vmatprep.mubr.f32.mxu0 0.0
      %v804 = vand.u32 %v196, 4294901760
      %805 = vmatmul.mubr.f32.gmra.mrb[0].mxu0 %v804
      %v806 = vpop.f32.mrb[0].mxu0
      %v807 = vadd.f32 %v688, %v806
      %v808 = vpop.f32.mrb[0].mxu0
      %809 = vmatprep.mubr.f32.mxu0 0.0
      %v810 = vand.u32 %v199, 4294901760
      %811 = vmatmul.mubr.f32.gmra.mrb[0].mxu0 %v810
      %v812 = vpop.f32.mrb[0].mxu0
      %v813 = vadd.f32 %v696, %v812
      %v814 = vpop.f32.mrb[0].mxu0
      %815 = vmatprep.mubr.f32.mxu0 0.0
      %v816 = vand.u32 %v202, 4294901760
      %817 = vmatmul.mubr.f32.gmra.mrb[0].mxu0 %v816
      %v818 = vpop.f32.mrb[0].mxu0
      %v819 = vadd.f32 %v704, %v818
      %v820 = vpop.f32.mrb[0].mxu0
      %821 = vmatprep.mubr.f32.mxu0 0.0
      %v822 = vand.u32 %v205, 4294901760
      %823 = vmatmul.mubr.f32.gmra.mrb[0].mxu0 %v822
      %v824 = vpop.f32.mrb[0].mxu0
      %v825 = vadd.f32 %v712, %v824
      %v826 = vpop.f32.mrb[0].mxu0
      %827 = vdwg.mxu0
      %828 = vmatprep.subr.mxu0 0.0
      %829 = vmatpush1.msra.mxu0 1.0
      %830 = vmatprep.subr.mxu0 0.0
      %831 = vmatpush1.msra.mxu0 1.0
      %832 = vmatprep.subr.mxu0 0.0
      %833 = vmatpush1.msra.mxu0 1.0
      %834 = vmatprep.subr.mxu0 0.0
      %835 = vmatpush1.msra.mxu0 1.0
      %836 = vmatprep.subr.mxu0 0.0
      %837 = vmatpush1.msra.mxu0 1.0
      %838 = vmatprep.subr.mxu0 0.0
      %839 = vmatpush1.msra.mxu0 1.0
      %840 = vmatprep.subr.mxu0 0.0
      %841 = vmatpush1.msra.mxu0 0.0
      %842 = vmatprep.subr.mxu0 0.0
      %843 = vmatpush1.msra.mxu0 0.0
      %844 = vmatprep.subr.mxu0 0.0
      %845 = vmatpush1.msra.mxu0 0.0
      %846 = vmatprep.subr.mxu0 0.0
      %847 = vmatpush1.msra.mxu0 0.0
      %848 = vmatprep.subr.mxu0 0.0
      %849 = vmatpush1.msra.mxu0 0.0
      %850 = vmatprep.subr.mxu0 0.0
      %851 = vmatpush1.msra.mxu0 0.0
      %852 = vmatprep.subr.mxu0 0.0
      %853 = vmatpush1.msra.mxu0 0.0
      %854 = vmatprep.subr.mxu0 0.0
      %855 = vmatpush1.msra.mxu0 0.0
      %856 = vmatprep.subr.mxu0 0.0
      %857 = vmatpush1.msra.mxu0 0.0
      %858 = vmatprep.subr.mxu0 0.0
      %859 = vmatpush1.msra.mxu0 0.0
      %860 = vmatprep.subr.mxu0 0.0
      %861 = vmatpush1.msra.mxu0 0.0
      %862 = vmatprep.subr.mxu0 0.0
      %863 = vmatpush1.msra.mxu0 0.0
      %864 = vmatprep.subr.mxu0 0.0
      %865 = vmatpush1.msra.mxu0 0.0
      %866 = vmatprep.subr.mxu0 0.0
      %867 = vmatpush1.msra.mxu0 0.0
      %868 = vmatprep.subr.mxu0 0.0
      %869 = vmatpush1.msra.mxu0 0.0
      %870 = vmatprep.subr.mxu0 0.0
      %871 = vmatpush1.msra.mxu0 0.0
      %872 = vmatprep.subr.mxu0 0.0
      %873 = vmatpush1.msra.mxu0 0.0
      %874 = vmatprep.subr.mxu0 0.0
      %875 = vmatpush1.msra.mxu0 0.0
      %876 = vmatprep.subr.mxu0 0.0
      %877 = vmatpush1.msra.mxu0 0.0
      %878 = vmatprep.subr.mxu0 0.0
      %879 = vmatpush1.msra.mxu0 0.0
      %880 = vmatprep.subr.mxu0 0.0
      %881 = vmatpush1.msra.mxu0 0.0
      %882 = vmatprep.subr.mxu0 0.0
      %883 = vmatpush1.msra.mxu0 0.0
      %884 = vmatprep.subr.mxu0 0.0
      %885 = vmatpush1.msra.mxu0 0.0
      %886 = vmatprep.subr.mxu0 0.0
      %887 = vmatpush1.msra.mxu0 0.0
      %888 = vmatprep.subr.mxu0 0.0
      %889 = vmatpush1.msra.mxu0 0.0
      %890 = vmatprep.subr.mxu0 0.0
      %891 = vmatpush1.msra.mxu0 0.0
      %892 = vmatprep.mubr.f32.mxu0 0.0
      %v893 = vand.u32 %v184, 4294901760
      %894 = vmatmul.mubr.f32.gmra.mrb[0].mxu0 %v893
      %v895 = vpop.f32.mrb[0].mxu0
      %v896 = vadd.f32 %v783, %v895
      %v897 = vpop.f32.mrb[0].mxu0
      %898 = vmatprep.mubr.f32.mxu0 0.0
      %v899 = vand.u32 %v187, 4294901760
      %900 = vmatmul.mubr.f32.gmra.mrb[0].mxu0 %v899
      %v901 = vpop.f32.mrb[0].mxu0
      %v902 = vadd.f32 %v789, %v901
      %v903 = vpop.f32.mrb[0].mxu0
      %904 = vmatprep.mubr.f32.mxu0 0.0
      %v905 = vand.u32 %v190, 4294901760
      %906 = vmatmul.mubr.f32.gmra.mrb[0].mxu0 %v905
      %v907 = vpop.f32.mrb[0].mxu0
      %v908 = vadd.f32 %v795, %v907
      %v909 = vpop.f32.mrb[0].mxu0
      %910 = vmatprep.mubr.f32.mxu0 0.0
      %v911 = vand.u32 %v193, 4294901760
      %912 = vmatmul.mubr.f32.gmra.mrb[0].mxu0 %v911
      %v913 = vpop.f32.mrb[0].mxu0
      %v914 = vadd.f32 %v801, %v913
      %v915 = vpop.f32.mrb[0].mxu0
      %916 = vmatprep.mubr.f32.mxu0 0.0
      %v917 = vand.u32 %v196, 4294901760
      %918 = vmatmul.mubr.f32.gmra.mrb[0].mxu0 %v917
      %v919 = vpop.f32.mrb[0].mxu0
      %v920 = vadd.f32 %v807, %v919
      %v921 = vpop.f32.mrb[0].mxu0
      %922 = vmatprep.mubr.f32.mxu0 0.0
      %v923 = vand.u32 %v199, 4294901760
      %924 = vmatmul.mubr.f32.gmra.mrb[0].mxu0 %v923
      %v925 = vpop.f32.mrb[0].mxu0
      %v926 = vadd.f32 %v813, %v925
      %v927 = vpop.f32.mrb[0].mxu0
      %928 = vmatprep.mubr.f32.mxu0 0.0
      %v929 = vand.u32 %v202, 4294901760
      %930 = vmatmul.mubr.f32.gmra.mrb[0].mxu0 %v929
      %v931 = vpop.f32.mrb[0].mxu0
      %v932 = vadd.f32 %v819, %v931
      %v933 = vpop.f32.mrb[0].mxu0
      %934 = vmatprep.mubr.f32.mxu0 0.0
      %v935 = vand.u32 %v205, 4294901760
      %936 = vmatmul.mubr.f32.gmra.mrb[0].mxu0 %v935
      %v937 = vpop.f32.mrb[0].mxu0
      %v938 = vadd.f32 %v825, %v937
      %v939 = vpop.f32.mrb[0].mxu0
      %940 = vdwg.mxu0
      %v941 = vmul.f32 %v896, 0.020833334
      %v942 = vmul.f32 %v902, 0.020833334
      %v943 = vmul.f32 %v908, 0.020833334
      %v944 = vmul.f32 %v914, 0.020833334
      %v945 = vmul.f32 %v920, 0.020833334
      %v946 = vmul.f32 %v926, 0.020833334
      %v947 = vmul.f32 %v932, 0.020833334
      %v948 = vmul.f32 %v938, 0.020833334
      %950 = vset.pattern.permute.xlu0 0
      %951 = vperm.xlu0 %950, %v941
      %v952 = vpop.permute.xlu0 %951
      %955 = vset.pattern.permute.xlu0 0
      %956 = vperm.xlu0 %955, %v942
      %v957 = vpop.permute.xlu0 %956
      %960 = vset.pattern.permute.xlu0 0
      %961 = vperm.xlu0 %960, %v943
      %v962 = vpop.permute.xlu0 %961
      %965 = vset.pattern.permute.xlu0 0
      %966 = vperm.xlu0 %965, %v944
      %v967 = vpop.permute.xlu0 %966
      %970 = vset.pattern.permute.xlu0 0
      %971 = vperm.xlu0 %970, %v945
      %v972 = vpop.permute.xlu0 %971
      %975 = vset.pattern.permute.xlu0 0
      %976 = vperm.xlu0 %975, %v946
      %v977 = vpop.permute.xlu0 %976
      %980 = vset.pattern.permute.xlu0 0
      %981 = vperm.xlu0 %980, %v947
      %v982 = vpop.permute.xlu0 %981
      %985 = vset.pattern.permute.xlu0 0
      %986 = vperm.xlu0 %985, %v948
      %v987 = vpop.permute.xlu0 %986
      %v989 = vsub.f32 %v174, %v952
      %v990 = vsub.f32 %v175, %v957
      %v991 = vsub.f32 %v176, %v962
      %v992 = vsub.f32 %v177, %v967
      %v993 = vsub.f32 %v178, %v972
      %v994 = vsub.f32 %v179, %v977
      %v995 = vsub.f32 %v180, %v982
      %v996 = vsub.f32 %v181, %v987
      %v997 = vmul.f32 %v989, %v989
      %v998 = vmul.f32 %v990, %v990
      %v999 = vmul.f32 %v991, %v991
      %v1000 = vmul.f32 %v992, %v992
      %v1001 = vmul.f32 %v993, %v993
      %v1002 = vmul.f32 %v994, %v994
      %v1003 = vmul.f32 %v995, %v995
      %v1004 = vmul.f32 %v996, %v996
      %v1006 = vsel %vm182, %v997, 0
      %v1009 = vsel %vm182, %v998, 0
      %v1012 = vsel %vm182, %v999, 0
      %v1015 = vsel %vm182, %v1000, 0
      %v1018 = vsel %vm182, %v1001, 0
      %v1021 = vsel %vm182, %v1002, 0
      %v1024 = vsel %vm182, %v1003, 0
      %v1027 = vsel %vm182, %v1004, 0
      %1029 = vmatprep.subr.mxu0 0.0
      %1030 = vmatpush1.msra.mxu0 1.0
      %1031 = vmatprep.subr.mxu0 0.0
      %1032 = vmatpush1.msra.mxu0 1.0
      %1033 = vmatprep.subr.mxu0 0.0
      %1034 = vmatpush1.msra.mxu0 1.0
      %1035 = vmatprep.subr.mxu0 0.0
      %1036 = vmatpush1.msra.mxu0 1.0
      %1037 = vmatprep.subr.mxu0 0.0
      %1038 = vmatpush1.msra.mxu0 1.0
      %1039 = vmatprep.subr.mxu0 0.0
      %1040 = vmatpush1.msra.mxu0 1.0
      %1041 = vmatprep.subr.mxu0 0.0
      %1042 = vmatpush1.msra.mxu0 0.0
      %1043 = vmatprep.subr.mxu0 0.0
      %1044 = vmatpush1.msra.mxu0 0.0
      %1045 = vmatprep.subr.mxu0 0.0
      %1046 = vmatpush1.msra.mxu0 0.0
      %1047 = vmatprep.subr.mxu0 0.0
      %1048 = vmatpush1.msra.mxu0 0.0
      %1049 = vmatprep.subr.mxu0 0.0
      %1050 = vmatpush1.msra.mxu0 0.0
      %1051 = vmatprep.subr.mxu0 0.0
      %1052 = vmatpush1.msra.mxu0 0.0
      %1053 = vmatprep.subr.mxu0 0.0
      %1054 = vmatpush1.msra.mxu0 0.0
      %1055 = vmatprep.subr.mxu0 0.0
      %1056 = vmatpush1.msra.mxu0 0.0
      %1057 = vmatprep.subr.mxu0 0.0
      %1058 = vmatpush1.msra.mxu0 0.0
      %1059 = vmatprep.subr.mxu0 0.0
      %1060 = vmatpush1.msra.mxu0 0.0
      %1061 = vmatprep.subr.mxu0 0.0
      %1062 = vmatpush1.msra.mxu0 0.0
      %1063 = vmatprep.subr.mxu0 0.0
      %1064 = vmatpush1.msra.mxu0 0.0
      %1065 = vmatprep.subr.mxu0 0.0
      %1066 = vmatpush1.msra.mxu0 0.0
      %1067 = vmatprep.subr.mxu0 0.0
      %1068 = vmatpush1.msra.mxu0 0.0
      %1069 = vmatprep.subr.mxu0 0.0
      %1070 = vmatpush1.msra.mxu0 0.0
      %1071 = vmatprep.subr.mxu0 0.0
      %1072 = vmatpush1.msra.mxu0 0.0
      %1073 = vmatprep.subr.mxu0 0.0
      %1074 = vmatpush1.msra.mxu0 0.0
      %1075 = vmatprep.subr.mxu0 0.0
      %1076 = vmatpush1.msra.mxu0 0.0
      %1077 = vmatprep.subr.mxu0 0.0
      %1078 = vmatpush1.msra.mxu0 0.0
      %1079 = vmatprep.subr.mxu0 0.0
      %1080 = vmatpush1.msra.mxu0 0.0
      %1081 = vmatprep.subr.mxu0 0.0
      %1082 = vmatpush1.msra.mxu0 0.0
      %1083 = vmatprep.subr.mxu0 0.0
      %1084 = vmatpush1.msra.mxu0 0.0
      %1085 = vmatprep.subr.mxu0 0.0
      %1086 = vmatpush1.msra.mxu0 0.0
      %1087 = vmatprep.subr.mxu0 0.0
      %1088 = vmatpush1.msra.mxu0 0.0
      %1089 = vmatprep.subr.mxu0 0.0
      %1090 = vmatpush1.msra.mxu0 0.0
      %1091 = vmatprep.subr.mxu0 0.0
      %1092 = vmatpush1.msra.mxu0 0.0
      %1093 = vmatprep.mubr.f32.mxu0 0.0
      %v1094 = vand.u32 %v1006, 4294901760
      %v1095 = vsub.f32 %v1006, %v1094
      %v1096 = vand.u32 %v1095, 4294901760
      %v1097 = vsub.f32 %v1095, %v1096
      %v1098 = vand.u32 %v1097, 4294901760
      %1099 = vmatmul.mubr.f32.gmra.mrb[0].mxu0 %v1098
      %v1100 = vpop.f32.mrb[0].mxu0
      %v1101 = vadd.f32 0.0, %v1100
      %v1102 = vpop.f32.mrb[0].mxu0
      %1103 = vmatprep.mubr.f32.mxu0 0.0
      %v1104 = vand.u32 %v1009, 4294901760
      %v1105 = vsub.f32 %v1009, %v1104
      %v1106 = vand.u32 %v1105, 4294901760
      %v1107 = vsub.f32 %v1105, %v1106
      %v1108 = vand.u32 %v1107, 4294901760
      %1109 = vmatmul.mubr.f32.gmra.mrb[0].mxu0 %v1108
      %v1110 = vpop.f32.mrb[0].mxu0
      %v1111 = vadd.f32 0.0, %v1110
      %v1112 = vpop.f32.mrb[0].mxu0
      %1113 = vmatprep.mubr.f32.mxu0 0.0
      %v1114 = vand.u32 %v1012, 4294901760
      %v1115 = vsub.f32 %v1012, %v1114
      %v1116 = vand.u32 %v1115, 4294901760
      %v1117 = vsub.f32 %v1115, %v1116
      %v1118 = vand.u32 %v1117, 4294901760
      %1119 = vmatmul.mubr.f32.gmra.mrb[0].mxu0 %v1118
      %v1120 = vpop.f32.mrb[0].mxu0
      %v1121 = vadd.f32 0.0, %v1120
      %v1122 = vpop.f32.mrb[0].mxu0
      %1123 = vmatprep.mubr.f32.mxu0 0.0
      %v1124 = vand.u32 %v1015, 4294901760
      %v1125 = vsub.f32 %v1015, %v1124
      %v1126 = vand.u32 %v1125, 4294901760
      %v1127 = vsub.f32 %v1125, %v1126
      %v1128 = vand.u32 %v1127, 4294901760
      %1129 = vmatmul.mubr.f32.gmra.mrb[0].mxu0 %v1128
      %v1130 = vpop.f32.mrb[0].mxu0
      %v1131 = vadd.f32 0.0, %v1130
      %v1132 = vpop.f32.mrb[0].mxu0
      %1133 = vmatprep.mubr.f32.mxu0 0.0
      %v1134 = vand.u32 %v1018, 4294901760
      %v1135 = vsub.f32 %v1018, %v1134
      %v1136 = vand.u32 %v1135, 4294901760
      %v1137 = vsub.f32 %v1135, %v1136
      %v1138 = vand.u32 %v1137, 4294901760
      %1139 = vmatmul.mubr.f32.gmra.mrb[0].mxu0 %v1138
      %v1140 = vpop.f32.mrb[0].mxu0
      %v1141 = vadd.f32 0.0, %v1140
      %v1142 = vpop.f32.mrb[0].mxu0
      %1143 = vmatprep.mubr.f32.mxu0 0.0
      %v1144 = vand.u32 %v1021, 4294901760
      %v1145 = vsub.f32 %v1021, %v1144
      %v1146 = vand.u32 %v1145, 4294901760
      %v1147 = vsub.f32 %v1145, %v1146
      %v1148 = vand.u32 %v1147, 4294901760
      %1149 = vmatmul.mubr.f32.gmra.mrb[0].mxu0 %v1148
      %v1150 = vpop.f32.mrb[0].mxu0
      %v1151 = vadd.f32 0.0, %v1150
      %v1152 = vpop.f32.mrb[0].mxu0
      %1153 = vmatprep.mubr.f32.mxu0 0.0
      %v1154 = vand.u32 %v1024, 4294901760
      %v1155 = vsub.f32 %v1024, %v1154
      %v1156 = vand.u32 %v1155, 4294901760
      %v1157 = vsub.f32 %v1155, %v1156
      %v1158 = vand.u32 %v1157, 4294901760
      %1159 = vmatmul.mubr.f32.gmra.mrb[0].mxu0 %v1158
      %v1160 = vpop.f32.mrb[0].mxu0
      %v1161 = vadd.f32 0.0, %v1160
      %v1162 = vpop.f32.mrb[0].mxu0
      %1163 = vmatprep.mubr.f32.mxu0 0.0
      %v1164 = vand.u32 %v1027, 4294901760
      %v1165 = vsub.f32 %v1027, %v1164
      %v1166 = vand.u32 %v1165, 4294901760
      %v1167 = vsub.f32 %v1165, %v1166
      %v1168 = vand.u32 %v1167, 4294901760
      %1169 = vmatmul.mubr.f32.gmra.mrb[0].mxu0 %v1168
      %v1170 = vpop.f32.mrb[0].mxu0
      %v1171 = vadd.f32 0.0, %v1170
      %v1172 = vpop.f32.mrb[0].mxu0
      %1173 = vdwg.mxu0
      %1174 = vmatprep.subr.mxu0 0.0
      %1175 = vmatpush1.msra.mxu0 0.0
      %1176 = vmatprep.subr.mxu0 0.0
      %1177 = vmatpush1.msra.mxu0 0.0
      %1178 = vmatprep.subr.mxu0 0.0
      %1179 = vmatpush1.msra.mxu0 0.0
      %1180 = vmatprep.subr.mxu0 0.0
      %1181 = vmatpush1.msra.mxu0 0.0
      %1182 = vmatprep.subr.mxu0 0.0
      %1183 = vmatpush1.msra.mxu0 0.0
      %1184 = vmatprep.subr.mxu0 0.0
      %1185 = vmatpush1.msra.mxu0 0.0
      %1186 = vmatprep.subr.mxu0 0.0
      %1187 = vmatpush1.msra.mxu0 0.0
      %1188 = vmatprep.subr.mxu0 0.0
      %1189 = vmatpush1.msra.mxu0 0.0
      %1190 = vmatprep.subr.mxu0 0.0
      %1191 = vmatpush1.msra.mxu0 0.0
      %1192 = vmatprep.subr.mxu0 0.0
      %1193 = vmatpush1.msra.mxu0 0.0
      %1194 = vmatprep.subr.mxu0 0.0
      %1195 = vmatpush1.msra.mxu0 0.0
      %1196 = vmatprep.subr.mxu0 0.0
      %1197 = vmatpush1.msra.mxu0 0.0
      %1198 = vmatprep.subr.mxu0 0.0
      %1199 = vmatpush1.msra.mxu0 0.0
      %1200 = vmatprep.subr.mxu0 0.0
      %1201 = vmatpush1.msra.mxu0 0.0
      %1202 = vmatprep.subr.mxu0 0.0
      %1203 = vmatpush1.msra.mxu0 0.0
      %1204 = vmatprep.subr.mxu0 0.0
      %1205 = vmatpush1.msra.mxu0 0.0
      %1206 = vmatprep.subr.mxu0 0.0
      %1207 = vmatpush1.msra.mxu0 0.0
      %1208 = vmatprep.subr.mxu0 0.0
      %1209 = vmatpush1.msra.mxu0 0.0
      %1210 = vmatprep.subr.mxu0 0.0
      %1211 = vmatpush1.msra.mxu0 0.0
      %1212 = vmatprep.subr.mxu0 0.0
      %1213 = vmatpush1.msra.mxu0 0.0
      %1214 = vmatprep.subr.mxu0 0.0
      %1215 = vmatpush1.msra.mxu0 0.0
      %1216 = vmatprep.subr.mxu0 0.0
      %1217 = vmatpush1.msra.mxu0 0.0
      %1218 = vmatprep.subr.mxu0 0.0
      %1219 = vmatpush1.msra.mxu0 0.0
      %1220 = vmatprep.subr.mxu0 0.0
      %1221 = vmatpush1.msra.mxu0 0.0
      %1222 = vmatprep.subr.mxu0 0.0
      %1223 = vmatpush1.msra.mxu0 0.0
      %1224 = vmatprep.subr.mxu0 0.0
      %1225 = vmatpush1.msra.mxu0 0.0
      %1226 = vmatprep.subr.mxu0 0.0
      %1227 = vmatpush1.msra.mxu0 0.0
      %1228 = vmatprep.subr.mxu0 0.0
      %1229 = vmatpush1.msra.mxu0 0.0
      %1230 = vmatprep.subr.mxu0 0.0
      %1231 = vmatpush1.msra.mxu0 0.0
      %1232 = vmatprep.subr.mxu0 0.0
      %1233 = vmatpush1.msra.mxu0 0.0
      %1234 = vmatprep.subr.mxu0 0.0
      %1235 = vmatpush1.msra.mxu0 0.0
      %1236 = vmatprep.subr.mxu0 0.0
      %1237 = vmatpush1.msra.mxu0 0.0
      %1238 = vmatprep.mubr.f32.mxu0 0.0
      %v1239 = vand.u32 %v1006, 4294901760
      %1240 = vmatmul.mubr.f32.gmra.mrb[0].mxu0 %v1239
      %v1241 = vpop.f32.mrb[0].mxu0
      %v1242 = vadd.f32 %v1101, %v1241
      %v1243 = vpop.f32.mrb[0].mxu0
      %1244 = vmatprep.mubr.f32.mxu0 0.0
      %v1245 = vand.u32 %v1009, 4294901760
      %1246 = vmatmul.mubr.f32.gmra.mrb[0].mxu0 %v1245
      %v1247 = vpop.f32.mrb[0].mxu0
      %v1248 = vadd.f32 %v1111, %v1247
      %v1249 = vpop.f32.mrb[0].mxu0
      %1250 = vmatprep.mubr.f32.mxu0 0.0
      %v1251 = vand.u32 %v1012, 4294901760
      %1252 = vmatmul.mubr.f32.gmra.mrb[0].mxu0 %v1251
      %v1253 = vpop.f32.mrb[0].mxu0
      %v1254 = vadd.f32 %v1121, %v1253
      %v1255 = vpop.f32.mrb[0].mxu0
      %1256 = vmatprep.mubr.f32.mxu0 0.0
      %v1257 = vand.u32 %v1015, 4294901760
      %1258 = vmatmul.mubr.f32.gmra.mrb[0].mxu0 %v1257
      %v1259 = vpop.f32.mrb[0].mxu0
      %v1260 = vadd.f32 %v1131, %v1259
      %v1261 = vpop.f32.mrb[0].mxu0
      %1262 = vmatprep.mubr.f32.mxu0 0.0
      %v1263 = vand.u32 %v1018, 4294901760
      %1264 = vmatmul.mubr.f32.gmra.mrb[0].mxu0 %v1263
      %v1265 = vpop.f32.mrb[0].mxu0
      %v1266 = vadd.f32 %v1141, %v1265
      %v1267 = vpop.f32.mrb[0].mxu0
      %1268 = vmatprep.mubr.f32.mxu0 0.0
      %v1269 = vand.u32 %v1021, 4294901760
      %1270 = vmatmul.mubr.f32.gmra.mrb[0].mxu0 %v1269
      %v1271 = vpop.f32.mrb[0].mxu0
      %v1272 = vadd.f32 %v1151, %v1271
      %v1273 = vpop.f32.mrb[0].mxu0
      %1274 = vmatprep.mubr.f32.mxu0 0.0
      %v1275 = vand.u32 %v1024, 4294901760
      %1276 = vmatmul.mubr.f32.gmra.mrb[0].mxu0 %v1275
      %v1277 = vpop.f32.mrb[0].mxu0
      %v1278 = vadd.f32 %v1161, %v1277
      %v1279 = vpop.f32.mrb[0].mxu0
      %1280 = vmatprep.mubr.f32.mxu0 0.0
      %v1281 = vand.u32 %v1027, 4294901760
      %1282 = vmatmul.mubr.f32.gmra.mrb[0].mxu0 %v1281
      %v1283 = vpop.f32.mrb[0].mxu0
      %v1284 = vadd.f32 %v1171, %v1283
      %v1285 = vpop.f32.mrb[0].mxu0
      %1286 = vdwg.mxu0
      %1287 = vmatprep.subr.mxu0 0.0
      %1288 = vmatpush1.msra.mxu0 0.0
      %1289 = vmatprep.subr.mxu0 0.0
      %1290 = vmatpush1.msra.mxu0 0.0
      %1291 = vmatprep.subr.mxu0 0.0
      %1292 = vmatpush1.msra.mxu0 0.0
      %1293 = vmatprep.subr.mxu0 0.0
      %1294 = vmatpush1.msra.mxu0 0.0
      %1295 = vmatprep.subr.mxu0 0.0
      %1296 = vmatpush1.msra.mxu0 0.0
      %1297 = vmatprep.subr.mxu0 0.0
      %1298 = vmatpush1.msra.mxu0 0.0
      %1299 = vmatprep.subr.mxu0 0.0
      %1300 = vmatpush1.msra.mxu0 0.0
      %1301 = vmatprep.subr.mxu0 0.0
      %1302 = vmatpush1.msra.mxu0 0.0
      %1303 = vmatprep.subr.mxu0 0.0
      %1304 = vmatpush1.msra.mxu0 0.0
      %1305 = vmatprep.subr.mxu0 0.0
      %1306 = vmatpush1.msra.mxu0 0.0
      %1307 = vmatprep.subr.mxu0 0.0
      %1308 = vmatpush1.msra.mxu0 0.0
      %1309 = vmatprep.subr.mxu0 0.0
      %1310 = vmatpush1.msra.mxu0 0.0
      %1311 = vmatprep.subr.mxu0 0.0
      %1312 = vmatpush1.msra.mxu0 0.0
      %1313 = vmatprep.subr.mxu0 0.0
      %1314 = vmatpush1.msra.mxu0 0.0
      %1315 = vmatprep.subr.mxu0 0.0
      %1316 = vmatpush1.msra.mxu0 0.0
      %1317 = vmatprep.subr.mxu0 0.0
      %1318 = vmatpush1.msra.mxu0 0.0
      %1319 = vmatprep.subr.mxu0 0.0
      %1320 = vmatpush1.msra.mxu0 0.0
      %1321 = vmatprep.subr.mxu0 0.0
      %1322 = vmatpush1.msra.mxu0 0.0
      %1323 = vmatprep.subr.mxu0 0.0
      %1324 = vmatpush1.msra.mxu0 0.0
      %1325 = vmatprep.subr.mxu0 0.0
      %1326 = vmatpush1.msra.mxu0 0.0
      %1327 = vmatprep.subr.mxu0 0.0
      %1328 = vmatpush1.msra.mxu0 0.0
      %1329 = vmatprep.subr.mxu0 0.0
      %1330 = vmatpush1.msra.mxu0 0.0
      %1331 = vmatprep.subr.mxu0 0.0
      %1332 = vmatpush1.msra.mxu0 0.0
      %1333 = vmatprep.subr.mxu0 0.0
      %1334 = vmatpush1.msra.mxu0 0.0
      %1335 = vmatprep.subr.mxu0 0.0
      %1336 = vmatpush1.msra.mxu0 0.0
      %1337 = vmatprep.subr.mxu0 0.0
      %1338 = vmatpush1.msra.mxu0 0.0
      %1339 = vmatprep.subr.mxu0 0.0
      %1340 = vmatpush1.msra.mxu0 0.0
      %1341 = vmatprep.subr.mxu0 0.0
      %1342 = vmatpush1.msra.mxu0 0.0
      %1343 = vmatprep.subr.mxu0 0.0
      %1344 = vmatpush1.msra.mxu0 0.0
      %1345 = vmatprep.subr.mxu0 0.0
      %1346 = vmatpush1.msra.mxu0 0.0
      %1347 = vmatprep.subr.mxu0 0.0
      %1348 = vmatpush1.msra.mxu0 0.0
      %1349 = vmatprep.subr.mxu0 0.0
      %1350 = vmatpush1.msra.mxu0 0.0
      %1351 = vmatprep.mubr.f32.mxu0 0.0
      %v1352 = vand.u32 %v1006, 4294901760
      %v1353 = vsub.f32 %v1006, %v1352
      %1354 = vmatmul.mubr.f32.gmra.mrb[0].mxu0 %v1353
      %v1355 = vpop.f32.mrb[0].mxu0
      %v1356 = vadd.f32 %v1242, %v1355
      %v1357 = vpop.f32.mrb[0].mxu0
      %1358 = vmatprep.mubr.f32.mxu0 0.0
      %v1359 = vand.u32 %v1009, 4294901760
      %v1360 = vsub.f32 %v1009, %v1359
      %1361 = vmatmul.mubr.f32.gmra.mrb[0].mxu0 %v1360
      %v1362 = vpop.f32.mrb[0].mxu0
      %v1363 = vadd.f32 %v1248, %v1362
      %v1364 = vpop.f32.mrb[0].mxu0
      %1365 = vmatprep.mubr.f32.mxu0 0.0
      %v1366 = vand.u32 %v1012, 4294901760
      %v1367 = vsub.f32 %v1012, %v1366
      %1368 = vmatmul.mubr.f32.gmra.mrb[0].mxu0 %v1367
      %v1369 = vpop.f32.mrb[0].mxu0
      %v1370 = vadd.f32 %v1254, %v1369
      %v1371 = vpop.f32.mrb[0].mxu0
      %1372 = vmatprep.mubr.f32.mxu0 0.0
      %v1373 = vand.u32 %v1015, 4294901760
      %v1374 = vsub.f32 %v1015, %v1373
      %1375 = vmatmul.mubr.f32.gmra.mrb[0].mxu0 %v1374
      %v1376 = vpop.f32.mrb[0].mxu0
      %v1377 = vadd.f32 %v1260, %v1376
      %v1378 = vpop.f32.mrb[0].mxu0
      %1379 = vmatprep.mubr.f32.mxu0 0.0
      %v1380 = vand.u32 %v1018, 4294901760
      %v1381 = vsub.f32 %v1018, %v1380
      %1382 = vmatmul.mubr.f32.gmra.mrb[0].mxu0 %v1381
      %v1383 = vpop.f32.mrb[0].mxu0
      %v1384 = vadd.f32 %v1266, %v1383
      %v1385 = vpop.f32.mrb[0].mxu0
      %1386 = vmatprep.mubr.f32.mxu0 0.0
      %v1387 = vand.u32 %v1021, 4294901760
      %v1388 = vsub.f32 %v1021, %v1387
      %1389 = vmatmul.mubr.f32.gmra.mrb[0].mxu0 %v1388
      %v1390 = vpop.f32.mrb[0].mxu0
      %v1391 = vadd.f32 %v1272, %v1390
      %v1392 = vpop.f32.mrb[0].mxu0
      %1393 = vmatprep.mubr.f32.mxu0 0.0
      %v1394 = vand.u32 %v1024, 4294901760
      %v1395 = vsub.f32 %v1024, %v1394
      %1396 = vmatmul.mubr.f32.gmra.mrb[0].mxu0 %v1395
      %v1397 = vpop.f32.mrb[0].mxu0
      %v1398 = vadd.f32 %v1278, %v1397
      %v1399 = vpop.f32.mrb[0].mxu0
      %1400 = vmatprep.mubr.f32.mxu0 0.0
      %v1401 = vand.u32 %v1027, 4294901760
      %v1402 = vsub.f32 %v1027, %v1401
      %1403 = vmatmul.mubr.f32.gmra.mrb[0].mxu0 %v1402
      %v1404 = vpop.f32.mrb[0].mxu0
      %v1405 = vadd.f32 %v1284, %v1404
      %v1406 = vpop.f32.mrb[0].mxu0
      %1407 = vdwg.mxu0
      %1408 = vmatprep.subr.mxu0 0.0
      %1409 = vmatpush1.msra.mxu0 1.0
      %1410 = vmatprep.subr.mxu0 0.0
      %1411 = vmatpush1.msra.mxu0 1.0
      %1412 = vmatprep.subr.mxu0 0.0
      %1413 = vmatpush1.msra.mxu0 1.0
      %1414 = vmatprep.subr.mxu0 0.0
      %1415 = vmatpush1.msra.mxu0 1.0
      %1416 = vmatprep.subr.mxu0 0.0
      %1417 = vmatpush1.msra.mxu0 1.0
      %1418 = vmatprep.subr.mxu0 0.0
      %1419 = vmatpush1.msra.mxu0 1.0
      %1420 = vmatprep.subr.mxu0 0.0
      %1421 = vmatpush1.msra.mxu0 0.0
      %1422 = vmatprep.subr.mxu0 0.0
      %1423 = vmatpush1.msra.mxu0 0.0
      %1424 = vmatprep.subr.mxu0 0.0
      %1425 = vmatpush1.msra.mxu0 0.0
      %1426 = vmatprep.subr.mxu0 0.0
      %1427 = vmatpush1.msra.mxu0 0.0
      %1428 = vmatprep.subr.mxu0 0.0
      %1429 = vmatpush1.msra.mxu0 0.0
      %1430 = vmatprep.subr.mxu0 0.0
      %1431 = vmatpush1.msra.mxu0 0.0
      %1432 = vmatprep.subr.mxu0 0.0
      %1433 = vmatpush1.msra.mxu0 0.0
      %1434 = vmatprep.subr.mxu0 0.0
      %1435 = vmatpush1.msra.mxu0 0.0
      %1436 = vmatprep.subr.mxu0 0.0
      %1437 = vmatpush1.msra.mxu0 0.0
      %1438 = vmatprep.subr.mxu0 0.0
      %1439 = vmatpush1.msra.mxu0 0.0
      %1440 = vmatprep.subr.mxu0 0.0
      %1441 = vmatpush1.msra.mxu0 0.0
      %1442 = vmatprep.subr.mxu0 0.0
      %1443 = vmatpush1.msra.mxu0 0.0
      %1444 = vmatprep.subr.mxu0 0.0
      %1445 = vmatpush1.msra.mxu0 0.0
      %1446 = vmatprep.subr.mxu0 0.0
      %1447 = vmatpush1.msra.mxu0 0.0
      %1448 = vmatprep.subr.mxu0 0.0
      %1449 = vmatpush1.msra.mxu0 0.0
      %1450 = vmatprep.subr.mxu0 0.0
      %1451 = vmatpush1.msra.mxu0 0.0
      %1452 = vmatprep.subr.mxu0 0.0
      %1453 = vmatpush1.msra.mxu0 0.0
      %1454 = vmatprep.subr.mxu0 0.0
      %1455 = vmatpush1.msra.mxu0 0.0
      %1456 = vmatprep.subr.mxu0 0.0
      %1457 = vmatpush1.msra.mxu0 0.0
      %1458 = vmatprep.subr.mxu0 0.0
      %1459 = vmatpush1.msra.mxu0 0.0
      %1460 = vmatprep.subr.mxu0 0.0
      %1461 = vmatpush1.msra.mxu0 0.0
      %1462 = vmatprep.subr.mxu0 0.0
      %1463 = vmatpush1.msra.mxu0 0.0
      %1464 = vmatprep.subr.mxu0 0.0
      %1465 = vmatpush1.msra.mxu0 0.0
      %1466 = vmatprep.subr.mxu0 0.0
      %1467 = vmatpush1.msra.mxu0 0.0
      %1468 = vmatprep.subr.mxu0 0.0
      %1469 = vmatpush1.msra.mxu0 0.0
      %1470 = vmatprep.subr.mxu0 0.0
      %1471 = vmatpush1.msra.mxu0 0.0
      %1472 = vmatprep.mubr.f32.mxu0 0.0
      %v1473 = vand.u32 %v1006, 4294901760
      %v1474 = vsub.f32 %v1006, %v1473
      %v1475 = vand.u32 %v1474, 4294901760
      %1476 = vmatmul.mubr.f32.gmra.mrb[0].mxu0 %v1475
      %v1477 = vpop.f32.mrb[0].mxu0
      %v1478 = vadd.f32 %v1356, %v1477
      %v1479 = vpop.f32.mrb[0].mxu0
      %1480 = vmatprep.mubr.f32.mxu0 0.0
      %v1481 = vand.u32 %v1009, 4294901760
      %v1482 = vsub.f32 %v1009, %v1481
      %v1483 = vand.u32 %v1482, 4294901760
      %1484 = vmatmul.mubr.f32.gmra.mrb[0].mxu0 %v1483
      %v1485 = vpop.f32.mrb[0].mxu0
      %v1486 = vadd.f32 %v1363, %v1485
      %v1487 = vpop.f32.mrb[0].mxu0
      %1488 = vmatprep.mubr.f32.mxu0 0.0
      %v1489 = vand.u32 %v1012, 4294901760
      %v1490 = vsub.f32 %v1012, %v1489
      %v1491 = vand.u32 %v1490, 4294901760
      %1492 = vmatmul.mubr.f32.gmra.mrb[0].mxu0 %v1491
      %v1493 = vpop.f32.mrb[0].mxu0
      %v1494 = vadd.f32 %v1370, %v1493
      %v1495 = vpop.f32.mrb[0].mxu0
      %1496 = vmatprep.mubr.f32.mxu0 0.0
      %v1497 = vand.u32 %v1015, 4294901760
      %v1498 = vsub.f32 %v1015, %v1497
      %v1499 = vand.u32 %v1498, 4294901760
      %1500 = vmatmul.mubr.f32.gmra.mrb[0].mxu0 %v1499
      %v1501 = vpop.f32.mrb[0].mxu0
      %v1502 = vadd.f32 %v1377, %v1501
      %v1503 = vpop.f32.mrb[0].mxu0
      %1504 = vmatprep.mubr.f32.mxu0 0.0
      %v1505 = vand.u32 %v1018, 4294901760
      %v1506 = vsub.f32 %v1018, %v1505
      %v1507 = vand.u32 %v1506, 4294901760
      %1508 = vmatmul.mubr.f32.gmra.mrb[0].mxu0 %v1507
      %v1509 = vpop.f32.mrb[0].mxu0
      %v1510 = vadd.f32 %v1384, %v1509
      %v1511 = vpop.f32.mrb[0].mxu0
      %1512 = vmatprep.mubr.f32.mxu0 0.0
      %v1513 = vand.u32 %v1021, 4294901760
      %v1514 = vsub.f32 %v1021, %v1513
      %v1515 = vand.u32 %v1514, 4294901760
      %1516 = vmatmul.mubr.f32.gmra.mrb[0].mxu0 %v1515
      %v1517 = vpop.f32.mrb[0].mxu0
      %v1518 = vadd.f32 %v1391, %v1517
      %v1519 = vpop.f32.mrb[0].mxu0
      %1520 = vmatprep.mubr.f32.mxu0 0.0
      %v1521 = vand.u32 %v1024, 4294901760
      %v1522 = vsub.f32 %v1024, %v1521
      %v1523 = vand.u32 %v1522, 4294901760
      %1524 = vmatmul.mubr.f32.gmra.mrb[0].mxu0 %v1523
      %v1525 = vpop.f32.mrb[0].mxu0
      %v1526 = vadd.f32 %v1398, %v1525
      %v1527 = vpop.f32.mrb[0].mxu0
      %1528 = vmatprep.mubr.f32.mxu0 0.0
      %v1529 = vand.u32 %v1027, 4294901760
      %v1530 = vsub.f32 %v1027, %v1529
      %v1531 = vand.u32 %v1530, 4294901760
      %1532 = vmatmul.mubr.f32.gmra.mrb[0].mxu0 %v1531
      %v1533 = vpop.f32.mrb[0].mxu0
      %v1534 = vadd.f32 %v1405, %v1533
      %v1535 = vpop.f32.mrb[0].mxu0
      %1536 = vdwg.mxu0
      %1537 = vmatprep.subr.mxu0 0.0
      %1538 = vmatpush1.msra.mxu0 0.0
      %1539 = vmatprep.subr.mxu0 0.0
      %1540 = vmatpush1.msra.mxu0 0.0
      %1541 = vmatprep.subr.mxu0 0.0
      %1542 = vmatpush1.msra.mxu0 0.0
      %1543 = vmatprep.subr.mxu0 0.0
      %1544 = vmatpush1.msra.mxu0 0.0
      %1545 = vmatprep.subr.mxu0 0.0
      %1546 = vmatpush1.msra.mxu0 0.0
      %1547 = vmatprep.subr.mxu0 0.0
      %1548 = vmatpush1.msra.mxu0 0.0
      %1549 = vmatprep.subr.mxu0 0.0
      %1550 = vmatpush1.msra.mxu0 0.0
      %1551 = vmatprep.subr.mxu0 0.0
      %1552 = vmatpush1.msra.mxu0 0.0
      %1553 = vmatprep.subr.mxu0 0.0
      %1554 = vmatpush1.msra.mxu0 0.0
      %1555 = vmatprep.subr.mxu0 0.0
      %1556 = vmatpush1.msra.mxu0 0.0
      %1557 = vmatprep.subr.mxu0 0.0
      %1558 = vmatpush1.msra.mxu0 0.0
      %1559 = vmatprep.subr.mxu0 0.0
      %1560 = vmatpush1.msra.mxu0 0.0
      %1561 = vmatprep.subr.mxu0 0.0
      %1562 = vmatpush1.msra.mxu0 0.0
      %1563 = vmatprep.subr.mxu0 0.0
      %1564 = vmatpush1.msra.mxu0 0.0
      %1565 = vmatprep.subr.mxu0 0.0
      %1566 = vmatpush1.msra.mxu0 0.0
      %1567 = vmatprep.subr.mxu0 0.0
      %1568 = vmatpush1.msra.mxu0 0.0
      %1569 = vmatprep.subr.mxu0 0.0
      %1570 = vmatpush1.msra.mxu0 0.0
      %1571 = vmatprep.subr.mxu0 0.0
      %1572 = vmatpush1.msra.mxu0 0.0
      %1573 = vmatprep.subr.mxu0 0.0
      %1574 = vmatpush1.msra.mxu0 0.0
      %1575 = vmatprep.subr.mxu0 0.0
      %1576 = vmatpush1.msra.mxu0 0.0
      %1577 = vmatprep.subr.mxu0 0.0
      %1578 = vmatpush1.msra.mxu0 0.0
      %1579 = vmatprep.subr.mxu0 0.0
      %1580 = vmatpush1.msra.mxu0 0.0
      %1581 = vmatprep.subr.mxu0 0.0
      %1582 = vmatpush1.msra.mxu0 0.0
      %1583 = vmatprep.subr.mxu0 0.0
      %1584 = vmatpush1.msra.mxu0 0.0
      %1585 = vmatprep.subr.mxu0 0.0
      %1586 = vmatpush1.msra.mxu0 0.0
      %1587 = vmatprep.subr.mxu0 0.0
      %1588 = vmatpush1.msra.mxu0 0.0
      %1589 = vmatprep.subr.mxu0 0.0
      %1590 = vmatpush1.msra.mxu0 0.0
      %1591 = vmatprep.subr.mxu0 0.0
      %1592 = vmatpush1.msra.mxu0 0.0
      %1593 = vmatprep.subr.mxu0 0.0
      %1594 = vmatpush1.msra.mxu0 0.0
      %1595 = vmatprep.subr.mxu0 0.0
      %1596 = vmatpush1.msra.mxu0 0.0
      %1597 = vmatprep.subr.mxu0 0.0
      %1598 = vmatpush1.msra.mxu0 0.0
      %1599 = vmatprep.subr.mxu0 0.0
      %1600 = vmatpush1.msra.mxu0 0.0
      %1601 = vmatprep.mubr.f32.mxu0 0.0
      %v1602 = vand.u32 %v1006, 4294901760
      %1603 = vmatmul.mubr.f32.gmra.mrb[0].mxu0 %v1602
      %v1604 = vpop.f32.mrb[0].mxu0
      %v1605 = vadd.f32 %v1478, %v1604
      %v1606 = vpop.f32.mrb[0].mxu0
      %1607 = vmatprep.mubr.f32.mxu0 0.0
      %v1608 = vand.u32 %v1009, 4294901760
      %1609 = vmatmul.mubr.f32.gmra.mrb[0].mxu0 %v1608
      %v1610 = vpop.f32.mrb[0].mxu0
      %v1611 = vadd.f32 %v1486, %v1610
      %v1612 = vpop.f32.mrb[0].mxu0
      %1613 = vmatprep.mubr.f32.mxu0 0.0
      %v1614 = vand.u32 %v1012, 4294901760
      %1615 = vmatmul.mubr.f32.gmra.mrb[0].mxu0 %v1614
      %v1616 = vpop.f32.mrb[0].mxu0
      %v1617 = vadd.f32 %v1494, %v1616
      %v1618 = vpop.f32.mrb[0].mxu0
      %1619 = vmatprep.mubr.f32.mxu0 0.0
      %v1620 = vand.u32 %v1015, 4294901760
      %1621 = vmatmul.mubr.f32.gmra.mrb[0].mxu0 %v1620
      %v1622 = vpop.f32.mrb[0].mxu0
      %v1623 = vadd.f32 %v1502, %v1622
      %v1624 = vpop.f32.mrb[0].mxu0
      %1625 = vmatprep.mubr.f32.mxu0 0.0
      %v1626 = vand.u32 %v1018, 4294901760
      %1627 = vmatmul.mubr.f32.gmra.mrb[0].mxu0 %v1626
      %v1628 = vpop.f32.mrb[0].mxu0
      %v1629 = vadd.f32 %v1510, %v1628
      %v1630 = vpop.f32.mrb[0].mxu0
      %1631 = vmatprep.mubr.f32.mxu0 0.0
      %v1632 = vand.u32 %v1021, 4294901760
      %1633 = vmatmul.mubr.f32.gmra.mrb[0].mxu0 %v1632
      %v1634 = vpop.f32.mrb[0].mxu0
      %v1635 = vadd.f32 %v1518, %v1634
      %v1636 = vpop.f32.mrb[0].mxu0
      %1637 = vmatprep.mubr.f32.mxu0 0.0
      %v1638 = vand.u32 %v1024, 4294901760
      %1639 = vmatmul.mubr.f32.gmra.mrb[0].mxu0 %v1638
      %v1640 = vpop.f32.mrb[0].mxu0
      %v1641 = vadd.f32 %v1526, %v1640
      %v1642 = vpop.f32.mrb[0].mxu0
      %1643 = vmatprep.mubr.f32.mxu0 0.0
      %v1644 = vand.u32 %v1027, 4294901760
      %1645 = vmatmul.mubr.f32.gmra.mrb[0].mxu0 %v1644
      %v1646 = vpop.f32.mrb[0].mxu0
      %v1647 = vadd.f32 %v1534, %v1646
      %v1648 = vpop.f32.mrb[0].mxu0
      %1649 = vdwg.mxu0
      %1650 = vmatprep.subr.mxu0 0.0
      %1651 = vmatpush1.msra.mxu0 1.0
      %1652 = vmatprep.subr.mxu0 0.0
      %1653 = vmatpush1.msra.mxu0 1.0
      %1654 = vmatprep.subr.mxu0 0.0
      %1655 = vmatpush1.msra.mxu0 1.0
      %1656 = vmatprep.subr.mxu0 0.0
      %1657 = vmatpush1.msra.mxu0 1.0
      %1658 = vmatprep.subr.mxu0 0.0
      %1659 = vmatpush1.msra.mxu0 1.0
      %1660 = vmatprep.subr.mxu0 0.0
      %1661 = vmatpush1.msra.mxu0 1.0
      %1662 = vmatprep.subr.mxu0 0.0
      %1663 = vmatpush1.msra.mxu0 0.0
      %1664 = vmatprep.subr.mxu0 0.0
      %1665 = vmatpush1.msra.mxu0 0.0
      %1666 = vmatprep.subr.mxu0 0.0
      %1667 = vmatpush1.msra.mxu0 0.0
      %1668 = vmatprep.subr.mxu0 0.0
      %1669 = vmatpush1.msra.mxu0 0.0
      %1670 = vmatprep.subr.mxu0 0.0
      %1671 = vmatpush1.msra.mxu0 0.0
      %1672 = vmatprep.subr.mxu0 0.0
      %1673 = vmatpush1.msra.mxu0 0.0
      %1674 = vmatprep.subr.mxu0 0.0
      %1675 = vmatpush1.msra.mxu0 0.0
      %1676 = vmatprep.subr.mxu0 0.0
      %1677 = vmatpush1.msra.mxu0 0.0
      %1678 = vmatprep.subr.mxu0 0.0
      %1679 = vmatpush1.msra.mxu0 0.0
      %1680 = vmatprep.subr.mxu0 0.0
      %1681 = vmatpush1.msra.mxu0 0.0
      %1682 = vmatprep.subr.mxu0 0.0
      %1683 = vmatpush1.msra.mxu0 0.0
      %1684 = vmatprep.subr.mxu0 0.0
      %1685 = vmatpush1.msra.mxu0 0.0
      %1686 = vmatprep.subr.mxu0 0.0
      %1687 = vmatpush1.msra.mxu0 0.0
      %1688 = vmatprep.subr.mxu0 0.0
      %1689 = vmatpush1.msra.mxu0 0.0
      %1690 = vmatprep.subr.mxu0 0.0
      %1691 = vmatpush1.msra.mxu0 0.0
      %1692 = vmatprep.subr.mxu0 0.0
      %1693 = vmatpush1.msra.mxu0 0.0
      %1694 = vmatprep.subr.mxu0 0.0
      %1695 = vmatpush1.msra.mxu0 0.0
      %1696 = vmatprep.subr.mxu0 0.0
      %1697 = vmatpush1.msra.mxu0 0.0
      %1698 = vmatprep.subr.mxu0 0.0
      %1699 = vmatpush1.msra.mxu0 0.0
      %1700 = vmatprep.subr.mxu0 0.0
      %1701 = vmatpush1.msra.mxu0 0.0
      %1702 = vmatprep.subr.mxu0 0.0
      %1703 = vmatpush1.msra.mxu0 0.0
      %1704 = vmatprep.subr.mxu0 0.0
      %1705 = vmatpush1.msra.mxu0 0.0
      %1706 = vmatprep.subr.mxu0 0.0
      %1707 = vmatpush1.msra.mxu0 0.0
      %1708 = vmatprep.subr.mxu0 0.0
      %1709 = vmatpush1.msra.mxu0 0.0
      %1710 = vmatprep.subr.mxu0 0.0
      %1711 = vmatpush1.msra.mxu0 0.0
      %1712 = vmatprep.subr.mxu0 0.0
      %1713 = vmatpush1.msra.mxu0 0.0
      %1714 = vmatprep.mubr.f32.mxu0 0.0
      %v1715 = vand.u32 %v1006, 4294901760
      %1716 = vmatmul.mubr.f32.gmra.mrb[0].mxu0 %v1715
      %v1717 = vpop.f32.mrb[0].mxu0
      %v1718 = vadd.f32 %v1605, %v1717
      %v1719 = vpop.f32.mrb[0].mxu0
      %1720 = vmatprep.mubr.f32.mxu0 0.0
      %v1721 = vand.u32 %v1009, 4294901760
      %1722 = vmatmul.mubr.f32.gmra.mrb[0].mxu0 %v1721
      %v1723 = vpop.f32.mrb[0].mxu0
      %v1724 = vadd.f32 %v1611, %v1723
      %v1725 = vpop.f32.mrb[0].mxu0
      %1726 = vmatprep.mubr.f32.mxu0 0.0
      %v1727 = vand.u32 %v1012, 4294901760
      %1728 = vmatmul.mubr.f32.gmra.mrb[0].mxu0 %v1727
      %v1729 = vpop.f32.mrb[0].mxu0
      %v1730 = vadd.f32 %v1617, %v1729
      %v1731 = vpop.f32.mrb[0].mxu0
      %1732 = vmatprep.mubr.f32.mxu0 0.0
      %v1733 = vand.u32 %v1015, 4294901760
      %1734 = vmatmul.mubr.f32.gmra.mrb[0].mxu0 %v1733
      %v1735 = vpop.f32.mrb[0].mxu0
      %v1736 = vadd.f32 %v1623, %v1735
      %v1737 = vpop.f32.mrb[0].mxu0
      %1738 = vmatprep.mubr.f32.mxu0 0.0
      %v1739 = vand.u32 %v1018, 4294901760
      %1740 = vmatmul.mubr.f32.gmra.mrb[0].mxu0 %v1739
      %v1741 = vpop.f32.mrb[0].mxu0
      %v1742 = vadd.f32 %v1629, %v1741
      %v1743 = vpop.f32.mrb[0].mxu0
      %1744 = vmatprep.mubr.f32.mxu0 0.0
      %v1745 = vand.u32 %v1021, 4294901760
      %1746 = vmatmul.mubr.f32.gmra.mrb[0].mxu0 %v1745
      %v1747 = vpop.f32.mrb[0].mxu0
      %v1748 = vadd.f32 %v1635, %v1747
      %v1749 = vpop.f32.mrb[0].mxu0
      %1750 = vmatprep.mubr.f32.mxu0 0.0
      %v1751 = vand.u32 %v1024, 4294901760
      %1752 = vmatmul.mubr.f32.gmra.mrb[0].mxu0 %v1751
      %v1753 = vpop.f32.mrb[0].mxu0
      %v1754 = vadd.f32 %v1641, %v1753
      %v1755 = vpop.f32.mrb[0].mxu0
      %1756 = vmatprep.mubr.f32.mxu0 0.0
      %v1757 = vand.u32 %v1027, 4294901760
      %1758 = vmatmul.mubr.f32.gmra.mrb[0].mxu0 %v1757
      %v1759 = vpop.f32.mrb[0].mxu0
      %v1760 = vadd.f32 %v1647, %v1759
      %v1761 = vpop.f32.mrb[0].mxu0
      %1762 = vdwg.mxu0
      %v1763 = vmul.f32 %v1718, 0.020833334
      %v1764 = vmul.f32 %v1724, 0.020833334
      %v1765 = vmul.f32 %v1730, 0.020833334
      %v1766 = vmul.f32 %v1736, 0.020833334
      %v1767 = vmul.f32 %v1742, 0.020833334
      %v1768 = vmul.f32 %v1748, 0.020833334
      %v1769 = vmul.f32 %v1754, 0.020833334
      %v1770 = vmul.f32 %v1760, 0.020833334
      %v1771 = vadd.f32 %v1763, 1e-05
      %v1772 = vadd.f32 %v1764, 1e-05
      %v1773 = vadd.f32 %v1765, 1e-05
      %v1774 = vadd.f32 %v1766, 1e-05
      %v1775 = vadd.f32 %v1767, 1e-05
      %v1776 = vadd.f32 %v1768, 1e-05
      %v1777 = vadd.f32 %v1769, 1e-05
      %v1778 = vadd.f32 %v1770, 1e-05
      %v1779 = vrsqrt.pop %v1771
      %v1780 = vrsqrt.pop %v1772
      %v1781 = vrsqrt.pop %v1773
      %v1782 = vrsqrt.pop %v1774
      %v1783 = vrsqrt.pop %v1775
      %v1784 = vrsqrt.pop %v1776
      %v1785 = vrsqrt.pop %v1777
      %v1786 = vrsqrt.pop %v1778
      %v1787 = vld [vmem:[%s1] sm:$0x1]
      %v1788 = vld [vmem:[%s2] sm:$0x1]
      %1790 = vset.pattern.permute.xlu0 0
      %1791 = vperm.xlu0 %1790, %v1779
      %v1792 = vpop.permute.xlu0 %1791
      %1795 = vset.pattern.permute.xlu0 0
      %1796 = vperm.xlu0 %1795, %v1780
      %v1797 = vpop.permute.xlu0 %1796
      %1800 = vset.pattern.permute.xlu0 0
      %1801 = vperm.xlu0 %1800, %v1781
      %v1802 = vpop.permute.xlu0 %1801
      %1805 = vset.pattern.permute.xlu0 0
      %1806 = vperm.xlu0 %1805, %v1782
      %v1807 = vpop.permute.xlu0 %1806
      %1810 = vset.pattern.permute.xlu0 0
      %1811 = vperm.xlu0 %1810, %v1783
      %v1812 = vpop.permute.xlu0 %1811
      %1815 = vset.pattern.permute.xlu0 0
      %1816 = vperm.xlu0 %1815, %v1784
      %v1817 = vpop.permute.xlu0 %1816
      %1820 = vset.pattern.permute.xlu0 0
      %1821 = vperm.xlu0 %1820, %v1785
      %v1822 = vpop.permute.xlu0 %1821
      %1825 = vset.pattern.permute.xlu0 0
      %1826 = vperm.xlu0 %1825, %v1786
      %v1827 = vpop.permute.xlu0 %1826
      %v1829 = vmul.f32 %v989, %v1792
      %v1830 = vmul.f32 %v990, %v1797
      %v1831 = vmul.f32 %v991, %v1802
      %v1832 = vmul.f32 %v992, %v1807
      %v1833 = vmul.f32 %v993, %v1812
      %v1834 = vmul.f32 %v994, %v1817
      %v1835 = vmul.f32 %v995, %v1822
      %v1836 = vmul.f32 %v996, %v1827
      %v1838 = vlaneseq
      %v1839 = vshrl.u32 %v1838, 7
      %v1840 = vsub.s32 0, %v1839
      %v1841 = vrot.slane %v1787, %v1840
      %v1843 = vmul.f32 %v1829, %v1841
      %v1844 = vmul.f32 %v1830, %v1841
      %v1845 = vmul.f32 %v1831, %v1841
      %v1846 = vmul.f32 %v1832, %v1841
      %v1847 = vmul.f32 %v1833, %v1841
      %v1848 = vmul.f32 %v1834, %v1841
      %v1849 = vmul.f32 %v1835, %v1841
      %v1850 = vmul.f32 %v1836, %v1841
      %v1852 = vlaneseq
      %v1853 = vshrl.u32 %v1852, 7
      %v1854 = vsub.s32 0, %v1853
      %v1855 = vrot.slane %v1788, %v1854
      %v1857 = vadd.f32 %v1843, %v1855
      %v1858 = vadd.f32 %v1844, %v1855
      %v1859 = vadd.f32 %v1845, %v1855
      %v1860 = vadd.f32 %v1846, %v1855
      %v1861 = vadd.f32 %v1847, %v1855
      %v1862 = vadd.f32 %v1848, %v1855
      %v1863 = vadd.f32 %v1849, %v1855
      %v1864 = vadd.f32 %v1850, %v1855
      %1865 = vst.msk [vmem:[%s172] sm:$0xff] %vm182, %v1857
      %1866 = vst.msk [vmem:[%s172 + $0x8] sm:$0xff] %vm182, %v1858
      %1867 = vst.msk [vmem:[%s172 + $0x10] sm:$0xff] %vm182, %v1859
      %1868 = vst.msk [vmem:[%s172 + $0x18] sm:$0xff] %vm182, %v1860
      %1869 = vst.msk [vmem:[%s172 + $0x20] sm:$0xff] %vm182, %v1861
      %1870 = vst.msk [vmem:[%s172 + $0x28] sm:$0xff] %vm182, %v1862
      %1871 = vst.msk [vmem:[%s172 + $0x30] sm:$0xff] %vm182, %v1863
      %1872 = vst.msk [vmem:[%s172 + $0x38] sm:$0xff] %vm182, %v1864
      %s1873 = smul.u32 8, %s14
      %p1874 = scmp.lt.s32.totalorder %s1873, 63
      %s1875 = scalar_select %p1874, %s1873, 63
      %s1876 = smul.addr %s1875, 8
      %s1877 = scalar_lea.vmem %s3, %s1876
      // Predicated region
      $region33: #{with_bias_layernorm.1} parent=31 // pred_check
        %p1878 = pneg %p100
      $region34: #{with_bias_layernorm.1} parent=31 // pred_check_branch
        %1880 = sbr.rel (%p1878) target = $region36
      $region35: #{with_bias_layernorm.1} parent=31 // pred_region
        %s1881 = smul.u32 8, %s14
      $region36: #{with_bias_layernorm.1} parent=31 // pred_fallthru
        _
    $region32: #{with_bias_layernorm.1} parent=5 // pred_fallthru
      _
    %p1882 = scmp.le.s32.totalorder 2, %s9
    // Predicated region
    $region37: #{with_bias_layernorm.1} parent=5 // pred_check
      %p1883 = pneg %p1882
    $region38: #{with_bias_layernorm.1} parent=5 // pred_check_branch
      %1885 = sbr.rel (%p1883) target = $region40
    $region39: #{with_bias_layernorm.1} parent=5 // pred_region
      %s1886 = ssub.s32 %s9, 2
      // Predicated region
      $region41: #{with_bias_layernorm.1} parent=39 // pred_check
        %p1887 = pneg %p106
      $region42: #{with_bias_layernorm.1} parent=39 // pred_check_branch
        %1889 = sbr.rel (%p1887) target = $region44
      $region43: #{with_bias_layernorm.1} parent=39 // pred_region
        %s1890 = smul.u32 8, %s15
        %p1891 = scmp.lt.s32.totalorder %s1890, 63
        %s1892 = scalar_select %p1891, %s1890, 63
        %s1893 = smul.addr %s1892, 8
        %s1894 = scalar_lea.vmem %s3, %s1893
      $region44: #{with_bias_layernorm.1} parent=39 // pred_fallthru
        _
    $region40: #{with_bias_layernorm.1} parent=5 // pred_fallthru
      _
  $region6: #{with_bias_layernorm.1} parent=0 // loop_footer
    %s13 = sadd.s32 1, %s9
  $region7: #{with_bias_layernorm.1} parent=0 // loop_footer_branch
    %8 = sbr.rel target = $region3
  $region8: #{with_bias_layernorm.1} parent=0 // loop_exit
    _

</llo_original>
